<compile_context>
chip_gen: v7x
topology: tpu7x:2x2x1
jax: 0.10.0
libtpu: 0.0.40
codegen_flags: <defaults>
</compile_context>

<pallas_src>
from functools import partial

import jax
import jax.numpy as jnp
from jax.experimental import pallas as pl
from jax.experimental.pallas import tpu as pltpu


def _deconv_kernel(a_ref, x_ref, w_ref, b_ref, out_ref, *, TH, W, Cin, Cout):
    # Accumulator starts from the phase-tiled bias (f32).
    acc = jnp.broadcast_to(b_ref[...], (TH * W, 4 * Cout))

    # Per-tap accumulation: 9 small MXU matmuls (K = Cin) into one f32
    # accumulator.  Windows are sliced directly off the ref (static offsets),
    # keeping the last dim (Cin -> lanes) untouched; the (TH, W) -> TH*W merge
    # is layout-friendly (W is a multiple of 8).
    for dy in range(3):
        for dx in range(3):
            win = x_ref[0, 0, dy:dy + TH, dx:dx + W, :]          # (TH, W, Cin) bf16
            lhs = win.reshape(TH * W, Cin)
            acc = acc + jnp.dot(lhs, w_ref[3 * dy + dx],
                                preferred_element_type=jnp.float32)

    # PReLU (single learnable scalar, PyTorch nn.PReLU() default), f32.
    a = a_ref[0]
    out_ref[0, 0] = jnp.where(acc >= 0, acc, a * acc).astype(out_ref.dtype)


def _phase_expand_weights(w_deconv, dtype):
    """ConvTranspose2d(k=4,s=2,p=1) weights (Cin,Cout,4,4) -> per-tap matmul
    weights (9, Cin, 4*Cout), column order (py, px, co).  Built with one
    gather + mask (no .at[].set scatters)."""
    Cin, Cout = w_deconv.shape[0], w_deconv.shape[1]
    d = jnp.arange(3)                      # tap offset dy / dx
    p = jnp.arange(2)                      # output phase py / px
    k = 3 - 2 * d[:, None] + p[None, :]    # kernel index k(tap, phase)
    valid = (k >= 0) & (k <= 3)
    kc = jnp.clip(k, 0, 3)

    w = w_deconv.astype(jnp.float32)
    # Wf[ci, co, dy, py, dx, px] = w[ci, co, ky(dy,py), kx(dx,px)] (masked)
    Wf = w[:, :, kc[:, :, None, None], kc[None, None, :, :]]
    mask = (valid[:, :, None, None] & valid[None, None, :, :]).astype(jnp.float32)
    Wf = Wf * mask
    # -> (dy, dx, Cin, py, px, Cout) -> (9, Cin, 4*Cout)
    Wf = jnp.transpose(Wf, (2, 4, 0, 3, 5, 1))
    return Wf.reshape(9, Cin, 4 * Cout).astype(dtype)


def _pick_row_tile(H, W, Cout):
    # ~1 MiB f32 output block per grid step (fits comfortably under v7x's
    # 64 MiB physical / 32 MiB scoped VMEM with double buffering), and prefer
    # >= 2 row tiles so the spatial axis gives pipelining and dual-TensorCore
    # occupancy even at batch 1.
    max_rows = max(1, (1 << 20) // (W * 4 * Cout * 4))
    th = min(H, max_rows)
    if H >= 2:
        th = min(th, (H + 1) // 2)
    while H % th:
        th -= 1
    return th


def deconv_block(x_nchw, w_deconv, bias, prelu_a, *, compute_dtype=jnp.bfloat16):
    """x: (N,Cin,H,W); w_deconv: (Cin,Cout,4,4) [ConvTranspose2d layout];
    bias: (Cout,); prelu_a: scalar.  Returns (N, Cout, 2H, 2W) float32."""
    N, Cin, H, W = x_nchw.shape
    Cout = w_deconv.shape[1]
    assert w_deconv.shape == (Cin, Cout, 4, 4), "kernel hardcodes k=4, s=2, p=1"
    assert W % 8 == 0, "W must be a multiple of 8 (sublane-friendly reshape)"

    TH = _pick_row_tile(H, W, Cout)
    R = H // TH

    # ---- wrapper glue (layout only) -----------------------------------------
    x = jnp.transpose(x_nchw, (0, 2, 3, 1)).astype(compute_dtype)      # NHWC bf16
    xp = jnp.pad(x, ((0, 0), (1, 1), (1, 1), (0, 0)))                  # 1-px halo
    # Overlapping row tiles (TH + 2 rows each).  Cin=32 < 128 lanes: the input
    # buffer is lane-sparse; accepted since the input is the small side.
    row_idx = jnp.arange(R)[:, None] * TH + jnp.arange(TH + 2)[None, :]
    xt = jnp.take(xp, row_idx, axis=1)                 # (N, R, TH+2, W+2, Cin)

    Wf = _phase_expand_weights(w_deconv, compute_dtype)        # (9, Cin, 4*Cout)
    b_t = jnp.tile(bias.astype(jnp.float32), 4).reshape(1, 4 * Cout)
    a_arr = jnp.asarray([prelu_a], jnp.float32)

    kernel = partial(_deconv_kernel, TH=TH, W=W, Cin=Cin, Cout=Cout)

    out = pl.pallas_call(
        kernel,
        out_shape=jax.ShapeDtypeStruct((N, R, TH * W, 4 * Cout), jnp.float32),
        grid_spec=pltpu.PrefetchScalarGridSpec(
            num_scalar_prefetch=0,
            grid=(N, R),
            in_specs=[
                # PReLU scalar -> SMEM
                pl.BlockSpec(memory_space=pltpu.MemorySpace.SMEM),
                # per-(batch, row-tile) padded input block (with 2-row halo)
                pl.BlockSpec((1, 1, TH + 2, W + 2, Cin),
                             lambda n, r: (n, r, 0, 0, 0)),
                # per-tap deconv weights, resident across the grid
                pl.BlockSpec((9, Cin, 4 * Cout), lambda n, r: (0, 0, 0)),
                # phase-tiled bias, resident
                pl.BlockSpec((1, 4 * Cout), lambda n, r: (0, 0)),
            ],
            out_specs=pl.BlockSpec((1, 1, TH * W, 4 * Cout),
                                   lambda n, r: (n, r, 0, 0)),
        ),
        compiler_params=pltpu.CompilerParams(
            dimension_semantics=("parallel", "parallel"),
            vmem_limit_bytes=32 * 1024 * 1024),
    )(a_arr, xt, Wf, b_t)

    # (N, R, TH*W, 4*Cout) -> (N, R, TH, W, py, px, Cout) -> (N, Cout, 2H, 2W)
    out = out.reshape(N, R, TH, W, 2, 2, Cout)
    out = jnp.transpose(out, (0, 6, 1, 2, 4, 3, 5)).reshape(N, Cout, 2 * H, 2 * W)
    return out


def _reference_forward(x, w_deconv, bias, prelu_a):
    """Pure-JAX reference of ConvTranspose2d(k=4,s=2,p=1,bias) + PReLU (NCHW)."""
    w_conv = jnp.transpose(jnp.flip(w_deconv, axis=(2, 3)), (1, 0, 2, 3))
    o = jax.lax.conv_general_dilated(
        x, w_conv, window_strides=(1, 1), padding=[(2, 2), (2, 2)],
        lhs_dilation=(2, 2), dimension_numbers=("NCHW", "OIHW", "NCHW"),
        precision=jax.lax.Precision.HIGHEST)
    o = o + bias[None, :, None, None]
    return jnp.where(o >= 0, o, prelu_a * o)


if __name__ == "__main__":
    key = jax.random.PRNGKey(0)
    k_x, k_w, k_b = jax.random.split(key, 3)

    N, Cin, Cout, H, W = 2, 32, 32, 16, 16
    # Test inputs are bf16-exact so the bf16-operand MXU path is lossless and
    # the comparison against the f32 reference isolates kernel logic.
    x = jax.random.normal(k_x, (N, Cin, H, W), dtype=jnp.float32)
    x = x.astype(jnp.bfloat16).astype(jnp.float32)
    w = 0.1 * jax.random.normal(k_w, (Cin, Cout, 4, 4), dtype=jnp.float32)
    w = w.astype(jnp.bfloat16).astype(jnp.float32)
    b = 0.1 * jax.random.normal(k_b, (Cout,), dtype=jnp.float32)
    a = 0.25  # nn.PReLU() default single-parameter init

    out = deconv_block(x, w, b, a)
    out = jax.block_until_ready(out)

    ref = _reference_forward(x, w, b, a)
    assert out.shape == (N, Cout, 2 * H, 2 * W)
    assert jnp.allclose(out, ref, atol=2e-3, rtol=2e-3), (
        float(jnp.max(jnp.abs(out - ref))))

    print("KERNEL_OK")
</pallas_src>

<mosaic_0001>
module attributes {stable_mosaic.version = 11 : i64} {
  func.func @_deconv_kernel(%arg0: i32, %arg1: i32, %arg2: memref<1xf32, #tpu.memory_space<smem>>, %arg3: memref<1x1x10x18x32xbf16, #tpu.memory_space<vmem>>, %arg4: memref<9x32x128xbf16, #tpu.memory_space<vmem>>, %arg5: memref<1x128xf32, #tpu.memory_space<vmem>>, %arg6: memref<1x1x128x128xf32, #tpu.memory_space<vmem>>) attributes {dimension_semantics = [#tpu.dimension_semantics<parallel>, #tpu.dimension_semantics<parallel>], iteration_bounds = array<i64: 2, 2>, scalar_prefetch = 0 : i64, scratch_operands = 0 : i64, tpu.core_type = #tpu.core_type<tc>, window_params = [{transform_indices = @transform_0, window_bounds = array<i64: 1>}, {transform_indices = @transform_1, window_bounds = array<i64: 1, 1, 10, 18, 32>}, {pipeline_mode = #tpu.pipeline_mode<synchronous>, transform_indices = @transform_2, window_bounds = array<i64: 9, 32, 128>}, {pipeline_mode = #tpu.pipeline_mode<synchronous>, transform_indices = @transform_3, window_bounds = array<i64: 1, 128>}, {transform_indices = @transform_4, window_bounds = array<i64: 1, 1, 128, 128>}]} {
    %c0 = arith.constant 0 : index
    %c0_0 = arith.constant 0 : index
    %0 = vector.load %arg5[%c0, %c0_0] : memref<1x128xf32, #tpu.memory_space<vmem>>, vector<1x128xf32>
    %1 = vector.shape_cast %0 : vector<1x128xf32> to vector<1x128xf32>
    %2 = vector.broadcast %1 : vector<1x128xf32> to vector<128x128xf32>
    %c0_1 = arith.constant 0 : index
    %c0_2 = arith.constant 0 : index
    %c0_3 = arith.constant 0 : index
    %c0_4 = arith.constant 0 : index
    %c0_5 = arith.constant 0 : index
    %3 = vector.load %arg3[%c0_1, %c0_2, %c0_3, %c0_4, %c0_5] : memref<1x1x10x18x32xbf16, #tpu.memory_space<vmem>>, vector<1x1x8x16x32xbf16>
    %4 = vector.shape_cast %3 : vector<1x1x8x16x32xbf16> to vector<8x16x32xbf16>
    %5 = vector.shape_cast %4 : vector<8x16x32xbf16> to vector<128x32xbf16>
    %c0_6 = arith.constant 0 : index
    %c0_7 = arith.constant 0 : index
    %c0_8 = arith.constant 0 : index
    %6 = vector.load %arg4[%c0_6, %c0_7, %c0_8] : memref<9x32x128xbf16, #tpu.memory_space<vmem>>, vector<1x32x128xbf16>
    %7 = vector.shape_cast %6 : vector<1x32x128xbf16> to vector<32x128xbf16>
    %cst = arith.constant dense<0.000000e+00> : vector<128x128xf32>
    %8 = tpu.matmul %5, %7, %cst {dimension_numbers = #tpu.dot_dimension_numbers<[1], [0], [0], [1], [0, 0, 1, 1], [], []>} : vector<128x32xbf16>, vector<32x128xbf16>, vector<128x128xf32> -> vector<128x128xf32>
    %9 = arith.addf %2, %8 : vector<128x128xf32>
    %c0_9 = arith.constant 0 : index
    %c0_10 = arith.constant 0 : index
    %c0_11 = arith.constant 0 : index
    %c1 = arith.constant 1 : index
    %c0_12 = arith.constant 0 : index
    %10 = vector.load %arg3[%c0_9, %c0_10, %c0_11, %c1, %c0_12] : memref<1x1x10x18x32xbf16, #tpu.memory_space<vmem>>, vector<1x1x8x16x32xbf16>
    %11 = vector.shape_cast %10 : vector<1x1x8x16x32xbf16> to vector<8x16x32xbf16>
    %12 = vector.shape_cast %11 : vector<8x16x32xbf16> to vector<128x32xbf16>
    %c1_13 = arith.constant 1 : index
    %c0_14 = arith.constant 0 : index
    %c0_15 = arith.constant 0 : index
    %13 = vector.load %arg4[%c1_13, %c0_14, %c0_15] : memref<9x32x128xbf16, #tpu.memory_space<vmem>>, vector<1x32x128xbf16>
    %14 = vector.shape_cast %13 : vector<1x32x128xbf16> to vector<32x128xbf16>
    %cst_16 = arith.constant dense<0.000000e+00> : vector<128x128xf32>
    %15 = tpu.matmul %12, %14, %cst_16 {dimension_numbers = #tpu.dot_dimension_numbers<[1], [0], [0], [1], [0, 0, 1, 1], [], []>} : vector<128x32xbf16>, vector<32x128xbf16>, vector<128x128xf32> -> vector<128x128xf32>
    %16 = arith.addf %9, %15 : vector<128x128xf32>
    %c0_17 = arith.constant 0 : index
    %c0_18 = arith.constant 0 : index
    %c0_19 = arith.constant 0 : index
    %c2 = arith.constant 2 : index
    %c0_20 = arith.constant 0 : index
    %17 = vector.load %arg3[%c0_17, %c0_18, %c0_19, %c2, %c0_20] : memref<1x1x10x18x32xbf16, #tpu.memory_space<vmem>>, vector<1x1x8x16x32xbf16>
    %18 = vector.shape_cast %17 : vector<1x1x8x16x32xbf16> to vector<8x16x32xbf16>
    %19 = vector.shape_cast %18 : vector<8x16x32xbf16> to vector<128x32xbf16>
    %c2_21 = arith.constant 2 : index
    %c0_22 = arith.constant 0 : index
    %c0_23 = arith.constant 0 : index
    %20 = vector.load %arg4[%c2_21, %c0_22, %c0_23] : memref<9x32x128xbf16, #tpu.memory_space<vmem>>, vector<1x32x128xbf16>
    %21 = vector.shape_cast %20 : vector<1x32x128xbf16> to vector<32x128xbf16>
    %cst_24 = arith.constant dense<0.000000e+00> : vector<128x128xf32>
    %22 = tpu.matmul %19, %21, %cst_24 {dimension_numbers = #tpu.dot_dimension_numbers<[1], [0], [0], [1], [0, 0, 1, 1], [], []>} : vector<128x32xbf16>, vector<32x128xbf16>, vector<128x128xf32> -> vector<128x128xf32>
    %23 = arith.addf %16, %22 : vector<128x128xf32>
    %c0_25 = arith.constant 0 : index
    %c0_26 = arith.constant 0 : index
    %c1_27 = arith.constant 1 : index
    %c0_28 = arith.constant 0 : index
    %c0_29 = arith.constant 0 : index
    %24 = vector.load %arg3[%c0_25, %c0_26, %c1_27, %c0_28, %c0_29] : memref<1x1x10x18x32xbf16, #tpu.memory_space<vmem>>, vector<1x1x8x16x32xbf16>
    %25 = vector.shape_cast %24 : vector<1x1x8x16x32xbf16> to vector<8x16x32xbf16>
    %26 = vector.shape_cast %25 : vector<8x16x32xbf16> to vector<128x32xbf16>
    %c3 = arith.constant 3 : index
    %c0_30 = arith.constant 0 : index
    %c0_31 = arith.constant 0 : index
    %27 = vector.load %arg4[%c3, %c0_30, %c0_31] : memref<9x32x128xbf16, #tpu.memory_space<vmem>>, vector<1x32x128xbf16>
    %28 = vector.shape_cast %27 : vector<1x32x128xbf16> to vector<32x128xbf16>
    %cst_32 = arith.constant dense<0.000000e+00> : vector<128x128xf32>
    %29 = tpu.matmul %26, %28, %cst_32 {dimension_numbers = #tpu.dot_dimension_numbers<[1], [0], [0], [1], [0, 0, 1, 1], [], []>} : vector<128x32xbf16>, vector<32x128xbf16>, vector<128x128xf32> -> vector<128x128xf32>
    %30 = arith.addf %23, %29 : vector<128x128xf32>
    %c0_33 = arith.constant 0 : index
    %c0_34 = arith.constant 0 : index
    %c1_35 = arith.constant 1 : index
    %c1_36 = arith.constant 1 : index
    %c0_37 = arith.constant 0 : index
    %31 = vector.load %arg3[%c0_33, %c0_34, %c1_35, %c1_36, %c0_37] : memref<1x1x10x18x32xbf16, #tpu.memory_space<vmem>>, vector<1x1x8x16x32xbf16>
    %32 = vector.shape_cast %31 : vector<1x1x8x16x32xbf16> to vector<8x16x32xbf16>
    %33 = vector.shape_cast %32 : vector<8x16x32xbf16> to vector<128x32xbf16>
    %c4 = arith.constant 4 : index
    %c0_38 = arith.constant 0 : index
    %c0_39 = arith.constant 0 : index
    %34 = vector.load %arg4[%c4, %c0_38, %c0_39] : memref<9x32x128xbf16, #tpu.memory_space<vmem>>, vector<1x32x128xbf16>
    %35 = vector.shape_cast %34 : vector<1x32x128xbf16> to vector<32x128xbf16>
    %cst_40 = arith.constant dense<0.000000e+00> : vector<128x128xf32>
    %36 = tpu.matmul %33, %35, %cst_40 {dimension_numbers = #tpu.dot_dimension_numbers<[1], [0], [0], [1], [0, 0, 1, 1], [], []>} : vector<128x32xbf16>, vector<32x128xbf16>, vector<128x128xf32> -> vector<128x128xf32>
    %37 = arith.addf %30, %36 : vector<128x128xf32>
    %c0_41 = arith.constant 0 : index
    %c0_42 = arith.constant 0 : index
    %c1_43 = arith.constant 1 : index
    %c2_44 = arith.constant 2 : index
    %c0_45 = arith.constant 0 : index
    %38 = vector.load %arg3[%c0_41, %c0_42, %c1_43, %c2_44, %c0_45] : memref<1x1x10x18x32xbf16, #tpu.memory_space<vmem>>, vector<1x1x8x16x32xbf16>
    %39 = vector.shape_cast %38 : vector<1x1x8x16x32xbf16> to vector<8x16x32xbf16>
    %40 = vector.shape_cast %39 : vector<8x16x32xbf16> to vector<128x32xbf16>
    %c5 = arith.constant 5 : index
    %c0_46 = arith.constant 0 : index
    %c0_47 = arith.constant 0 : index
    %41 = vector.load %arg4[%c5, %c0_46, %c0_47] : memref<9x32x128xbf16, #tpu.memory_space<vmem>>, vector<1x32x128xbf16>
    %42 = vector.shape_cast %41 : vector<1x32x128xbf16> to vector<32x128xbf16>
    %cst_48 = arith.constant dense<0.000000e+00> : vector<128x128xf32>
    %43 = tpu.matmul %40, %42, %cst_48 {dimension_numbers = #tpu.dot_dimension_numbers<[1], [0], [0], [1], [0, 0, 1, 1], [], []>} : vector<128x32xbf16>, vector<32x128xbf16>, vector<128x128xf32> -> vector<128x128xf32>
    %44 = arith.addf %37, %43 : vector<128x128xf32>
    %c0_49 = arith.constant 0 : index
    %c0_50 = arith.constant 0 : index
    %c2_51 = arith.constant 2 : index
    %c0_52 = arith.constant 0 : index
    %c0_53 = arith.constant 0 : index
    %45 = vector.load %arg3[%c0_49, %c0_50, %c2_51, %c0_52, %c0_53] : memref<1x1x10x18x32xbf16, #tpu.memory_space<vmem>>, vector<1x1x8x16x32xbf16>
    %46 = vector.shape_cast %45 : vector<1x1x8x16x32xbf16> to vector<8x16x32xbf16>
    %47 = vector.shape_cast %46 : vector<8x16x32xbf16> to vector<128x32xbf16>
    %c6 = arith.constant 6 : index
    %c0_54 = arith.constant 0 : index
    %c0_55 = arith.constant 0 : index
    %48 = vector.load %arg4[%c6, %c0_54, %c0_55] : memref<9x32x128xbf16, #tpu.memory_space<vmem>>, vector<1x32x128xbf16>
    %49 = vector.shape_cast %48 : vector<1x32x128xbf16> to vector<32x128xbf16>
    %cst_56 = arith.constant dense<0.000000e+00> : vector<128x128xf32>
    %50 = tpu.matmul %47, %49, %cst_56 {dimension_numbers = #tpu.dot_dimension_numbers<[1], [0], [0], [1], [0, 0, 1, 1], [], []>} : vector<128x32xbf16>, vector<32x128xbf16>, vector<128x128xf32> -> vector<128x128xf32>
    %51 = arith.addf %44, %50 : vector<128x128xf32>
    %c0_57 = arith.constant 0 : index
    %c0_58 = arith.constant 0 : index
    %c2_59 = arith.constant 2 : index
    %c1_60 = arith.constant 1 : index
    %c0_61 = arith.constant 0 : index
    %52 = vector.load %arg3[%c0_57, %c0_58, %c2_59, %c1_60, %c0_61] : memref<1x1x10x18x32xbf16, #tpu.memory_space<vmem>>, vector<1x1x8x16x32xbf16>
    %53 = vector.shape_cast %52 : vector<1x1x8x16x32xbf16> to vector<8x16x32xbf16>
    %54 = vector.shape_cast %53 : vector<8x16x32xbf16> to vector<128x32xbf16>
    %c7 = arith.constant 7 : index
    %c0_62 = arith.constant 0 : index
    %c0_63 = arith.constant 0 : index
    %55 = vector.load %arg4[%c7, %c0_62, %c0_63] : memref<9x32x128xbf16, #tpu.memory_space<vmem>>, vector<1x32x128xbf16>
    %56 = vector.shape_cast %55 : vector<1x32x128xbf16> to vector<32x128xbf16>
    %cst_64 = arith.constant dense<0.000000e+00> : vector<128x128xf32>
    %57 = tpu.matmul %54, %56, %cst_64 {dimension_numbers = #tpu.dot_dimension_numbers<[1], [0], [0], [1], [0, 0, 1, 1], [], []>} : vector<128x32xbf16>, vector<32x128xbf16>, vector<128x128xf32> -> vector<128x128xf32>
    %58 = arith.addf %51, %57 : vector<128x128xf32>
    %c0_65 = arith.constant 0 : index
    %c0_66 = arith.constant 0 : index
    %c2_67 = arith.constant 2 : index
    %c2_68 = arith.constant 2 : index
    %c0_69 = arith.constant 0 : index
    %59 = vector.load %arg3[%c0_65, %c0_66, %c2_67, %c2_68, %c0_69] : memref<1x1x10x18x32xbf16, #tpu.memory_space<vmem>>, vector<1x1x8x16x32xbf16>
    %60 = vector.shape_cast %59 : vector<1x1x8x16x32xbf16> to vector<8x16x32xbf16>
    %61 = vector.shape_cast %60 : vector<8x16x32xbf16> to vector<128x32xbf16>
    %c8 = arith.constant 8 : index
    %c0_70 = arith.constant 0 : index
    %c0_71 = arith.constant 0 : index
    %62 = vector.load %arg4[%c8, %c0_70, %c0_71] : memref<9x32x128xbf16, #tpu.memory_space<vmem>>, vector<1x32x128xbf16>
    %63 = vector.shape_cast %62 : vector<1x32x128xbf16> to vector<32x128xbf16>
    %cst_72 = arith.constant dense<0.000000e+00> : vector<128x128xf32>
    %64 = tpu.matmul %61, %63, %cst_72 {dimension_numbers = #tpu.dot_dimension_numbers<[1], [0], [0], [1], [0, 0, 1, 1], [], []>} : vector<128x32xbf16>, vector<32x128xbf16>, vector<128x128xf32> -> vector<128x128xf32>
    %65 = arith.addf %58, %64 : vector<128x128xf32>
    %c0_73 = arith.constant 0 : index
    %66 = memref.load %arg2[%c0_73] : memref<1xf32, #tpu.memory_space<smem>>
    %cst_74 = arith.constant 0.000000e+00 : f32
    %67 = vector.broadcast %cst_74 : f32 to vector<128x128xf32>
    %68 = arith.cmpf oge, %65, %67 : vector<128x128xf32>
    %69 = vector.broadcast %66 : f32 to vector<128x128xf32>
    %70 = arith.mulf %69, %65 : vector<128x128xf32>
    %71 = arith.select %68, %65, %70 : vector<128x128xi1>, vector<128x128xf32>
    %c0_75 = arith.constant 0 : index
    %c0_76 = arith.constant 0 : index
    %c0_77 = arith.constant 0 : index
    %c0_78 = arith.constant 0 : index
    %72 = vector.load %arg6[%c0_75, %c0_76, %c0_77, %c0_78] : memref<1x1x128x128xf32, #tpu.memory_space<vmem>>, vector<1x1x128x128xf32>
    %73 = vector.shape_cast %72 : vector<1x1x128x128xf32> to vector<128x128xf32>
    %74 = vector.shape_cast %71 : vector<128x128xf32> to vector<1x1x128x128xf32>
    tpu.vector_store %arg6[%c0_75, %c0_76, %c0_77, %c0_78], %74 {strides = array<i32>} : memref<1x1x128x128xf32, #tpu.memory_space<vmem>>, vector<1x1x128x128xf32>,
    return
  }
  func.func @transform_0(%arg0: i32, %arg1: i32) -> i32 {
    %c0_i32 = arith.constant 0 : i32
    %c0_i32_0 = arith.constant 0 : i32
    return %c0_i32 : i32
  }
  func.func @transform_1(%arg0: i32, %arg1: i32) -> (i32, i32, i32, i32, i32) {
    %c0_i32 = arith.constant 0 : i32
    %c0_i32_0 = arith.constant 0 : i32
    %c0_i32_1 = arith.constant 0 : i32
    %c0_i32_2 = arith.constant 0 : i32
    return %arg0, %arg1, %c0_i32, %c0_i32_0, %c0_i32_1 : i32, i32, i32, i32, i32
  }
  func.func @transform_2(%arg0: i32, %arg1: i32) -> (i32, i32, i32) {
    %c0_i32 = arith.constant 0 : i32
    %c0_i32_0 = arith.constant 0 : i32
    %c0_i32_1 = arith.constant 0 : i32
    %c0_i32_2 = arith.constant 0 : i32
    return %c0_i32, %c0_i32_0, %c0_i32_1 : i32, i32, i32
  }
  func.func @transform_3(%arg0: i32, %arg1: i32) -> (i32, i32) {
    %c0_i32 = arith.constant 0 : i32
    %c0_i32_0 = arith.constant 0 : i32
    %c0_i32_1 = arith.constant 0 : i32
    return %c0_i32, %c0_i32_0 : i32, i32
  }
  func.func @transform_4(%arg0: i32, %arg1: i32) -> (i32, i32, i32, i32) {
    %c0_i32 = arith.constant 0 : i32
    %c0_i32_0 = arith.constant 0 : i32
    %c0_i32_1 = arith.constant 0 : i32
    return %arg0, %arg1, %c0_i32, %c0_i32_0 : i32, i32, i32, i32
  }
}

</mosaic_0001>

<llo_original>
// kernel: tpu_custom_call.1
$region0: #{tpu_custom_call.1}
  #allocation0 [shape = 'u32[]', space=smem, size = 0x4, offset = 0x4, fixed_abs, tag = 'smem constant byte address 0x4 - core index']
  #allocation1 [shape = 'u32[144,128]{1,0:T(1,128)}', space=vmem, size = 0x12000, scoped, tag = 'internal scratch']
  #allocation2 [shape = 'f32[1]{0:T(128)S(6)}', space=smem, size = 0x200, scoped, tag = 'scoped memory for tpu_custom_call.1']
  %s0 = inlined_call_operand.<no memory space> [shape: f32[1], index: 0, kind: input, shape index: {}]
  %s1 = inlined_call_operand.vmem [shape: bf16[2,2,10,18,32], index: 1, kind: input, shape index: {}]
  %s2 = inlined_call_operand.vmem [shape: bf16[9,32,128], index: 2, kind: input, shape index: {}]
  %s3 = inlined_call_operand.vmem [shape: f32[1,128], index: 3, kind: input, shape index: {}]
  %s4 = inlined_call_operand.hbm [shape: f32[2,2,128,128], index: 4, kind: output, shape index: {}]
  %s5 = sld [smem:[#allocation0]]
  $region49: #{tpu_custom_call.1} parent=0
    _
  %s7 = ssub.s32 1, %s5
  %s8 = scalar_select 0, %s7, %s5
  %9 = sst [smem:[#allocation2]] %s0
  $region1: #{tpu_custom_call.1} parent=0
    #allocation3 [shape = 'u8[131072]{0}', space=vmem, size = 0x20000, scoped, tag = 'output window, operand 0']
    #allocation4 [shape = 's32[2]{0}', space=sflag, size = 0x8, scoped, tag = 'scoped memory for tpu_custom_call.1']
    %10 = vsyncpa [#allocation4], 0
    %s11 = scalar_lea.sflag [#allocation4], 1
    %12 = vsyncpa %s11, 0
    loop: start=0, step=1, limit=6
    $region2: #{tpu_custom_call.1} parent=1 // loop_pre_header
      _
    $region3: #{tpu_custom_call.1} parent=1 // loop_header
      %s14 = sphi 0, %s18
      %p15 = scmp.ge.s32.totalorder %s14, 6
      %s21 = sphi 0, %s33
      %s22 = sphi 0, %s29
      %s23 = sphi 0, %s21
      %s24 = sphi 0, %s22
      %s25 = sphi 0, %s23
      %s26 = sphi 0, %s24
      %s34 = sphi 0, %s34
      %s36 = sphi 0, %s34
      %s37 = sphi 0, %s36
      %s51 = sphi 0, %s37
      %s59 = sphi 0, %s61
      %s62 = sphi 0, %s59
      %s63 = sphi 0, %s62
      %s79 = sphi 0, %s63
      %s83 = sphi 0, %s83
      %s85 = sphi 0, %s83
      %s86 = sphi 0, %s85
      %s100 = sphi 0, %s86
      %s104 = sphi 0, %s104
      %s106 = sphi 0, %s104
      %s107 = sphi 0, %s106
      %s121 = sphi 0, %s107
      %s129 = sphi 0, %s131
      %s132 = sphi 0, %s129
      %s133 = sphi 0, %s132
      %s149 = sphi 0, %s133
    $region4: #{tpu_custom_call.1} parent=1 // loop_header_branch
      %17 = sbr.rel (%p15) target = $region8
    $region5: #{tpu_custom_call.1} parent=1 // loop_body
      %s19 = ssub.s32 %s14, 1
      %s20 = ssub.s32 %s14, 2
      %s27 = sadd.s32 1, %s22
      %p28 = scmp.ge.s32.totalorder %s27, 2
      %s29 = scalar_select %p28, 0, %s27
      %s30 = sadd.s32 1, %s21
      %s31 = scalar_select %p28, %s30, %s21
      %p32 = scmp.ge.s32.totalorder %s31, 2
      %s33 = scalar_select %p32, 0, %s31
      %s35 = sadd.s32 %s34, 1
      %p38 = scmp.eq.s32.totalorder %s14, 3
      %p39 = scmp.ne.s32.totalorder %s34, %s36
      %p40 = scmp.eq.s32.totalorder %s14, 0
      %p41 = por %p39, %p40
      %p42 = scmp.ne.s32.totalorder %s34, %s36
      %p43 = scmp.eq.s32.totalorder %s19, 3
      %p44 = por %p42, %p43
      %p45 = scmp.ne.s32.totalorder %s36, %s37
      %p46 = scmp.eq.s32.totalorder %s19, 0
      %p47 = por %p45, %p46
      %p48 = scmp.ne.s32.totalorder %s36, %s37
      %p49 = scmp.eq.s32.totalorder %s20, 3
      %p50 = por %p48, %p49
      %p52 = scmp.ne.s32.totalorder %s37, %s51
      %p53 = scmp.eq.s32.totalorder %s20, 0
      %p54 = por %p52, %p53
      %s55 = ssub.s32 %s21, %s33
      %s56 = ssub.s32 %s22, %s29
      %s57 = sor.u32 %s55, %s56
      %p58 = scmp.eq.s32.totalorder %s57, 0
      %s60 = sadd.s32 %s59, 1
      %s61 = scalar_select %p58, %s59, %s60
      %p64 = pneg %p58
      %p65 = scmp.eq.s32.totalorder %s14, 3
      %p66 = por %p64, %p65
      %p67 = scmp.ne.s32.totalorder %s59, %s62
      %p68 = scmp.eq.s32.totalorder %s14, 0
      %p69 = por %p67, %p68
      %p70 = scmp.ne.s32.totalorder %s59, %s62
      %p71 = scmp.eq.s32.totalorder %s19, 3
      %p72 = por %p70, %p71
      %p73 = scmp.ne.s32.totalorder %s62, %s63
      %p74 = scmp.eq.s32.totalorder %s19, 0
      %p75 = por %p73, %p74
      %p76 = scmp.ne.s32.totalorder %s62, %s63
      %p77 = scmp.eq.s32.totalorder %s20, 3
      %p78 = por %p76, %p77
      %p80 = scmp.ne.s32.totalorder %s63, %s79
      %p81 = scmp.eq.s32.totalorder %s20, 0
      %p82 = por %p80, %p81
      %s84 = sadd.s32 %s83, 1
      %p87 = scmp.eq.s32.totalorder %s14, 3
      %p88 = scmp.ne.s32.totalorder %s83, %s85
      %p89 = scmp.eq.s32.totalorder %s14, 0
      %p90 = por %p88, %p89
      %p91 = scmp.ne.s32.totalorder %s83, %s85
      %p92 = scmp.eq.s32.totalorder %s19, 3
      %p93 = por %p91, %p92
      %p94 = scmp.ne.s32.totalorder %s85, %s86
      %p95 = scmp.eq.s32.totalorder %s19, 0
      %p96 = por %p94, %p95
      %p97 = scmp.ne.s32.totalorder %s85, %s86
      %p98 = scmp.eq.s32.totalorder %s20, 3
      %p99 = por %p97, %p98
      %p101 = scmp.ne.s32.totalorder %s86, %s100
      %p102 = scmp.eq.s32.totalorder %s20, 0
      %p103 = por %p101, %p102
      %s105 = sadd.s32 %s104, 1
      %p108 = scmp.eq.s32.totalorder %s14, 3
      %p109 = scmp.ne.s32.totalorder %s104, %s106
      %p110 = scmp.eq.s32.totalorder %s14, 0
      %p111 = por %p109, %p110
      %p112 = scmp.ne.s32.totalorder %s104, %s106
      %p113 = scmp.eq.s32.totalorder %s19, 3
      %p114 = por %p112, %p113
      %p115 = scmp.ne.s32.totalorder %s106, %s107
      %p116 = scmp.eq.s32.totalorder %s19, 0
      %p117 = por %p115, %p116
      %p118 = scmp.ne.s32.totalorder %s106, %s107
      %p119 = scmp.eq.s32.totalorder %s20, 3
      %p120 = por %p118, %p119
      %p122 = scmp.ne.s32.totalorder %s107, %s121
      %p123 = scmp.eq.s32.totalorder %s20, 0
      %p124 = por %p122, %p123
      %s125 = ssub.s32 %s21, %s33
      %s126 = ssub.s32 %s22, %s29
      %s127 = sor.u32 %s125, %s126
      %p128 = scmp.eq.s32.totalorder %s127, 0
      %s130 = sadd.s32 %s129, 1
      %s131 = scalar_select %p128, %s129, %s130
      %p134 = pneg %p128
      %p135 = scmp.eq.s32.totalorder %s14, 3
      %p136 = por %p134, %p135
      %p137 = scmp.ne.s32.totalorder %s129, %s132
      %p138 = scmp.eq.s32.totalorder %s14, 0
      %p139 = por %p137, %p138
      %p140 = scmp.ne.s32.totalorder %s129, %s132
      %p141 = scmp.eq.s32.totalorder %s19, 3
      %p142 = por %p140, %p141
      %p143 = scmp.ne.s32.totalorder %s132, %s133
      %p144 = scmp.eq.s32.totalorder %s19, 0
      %p145 = por %p143, %p144
      %p146 = scmp.ne.s32.totalorder %s132, %s133
      %p147 = scmp.eq.s32.totalorder %s20, 3
      %p148 = por %p146, %p147
      %p150 = scmp.ne.s32.totalorder %s133, %s149
      %p151 = scmp.eq.s32.totalorder %s20, 0
      %p152 = por %p150, %p151
      %p153 = scmp.le.s32.totalorder 1, %s14
      %p154 = scmp.lt.s32.totalorder %s14, 5
      %p155 = pnand %p153, %p154
      %p156 = pneg %p155
      // Predicated region
      $region9: #{tpu_custom_call.1} parent=5 // pred_check
        _
      $region10: #{tpu_custom_call.1} parent=5 // pred_check_branch
        %158 = sbr.rel (%p155) target = $region12
      $region11: #{tpu_custom_call.1} parent=5 // pred_region
        %s159 = ssub.s32 %s14, 1
        // Predicated region
        $region13: #{tpu_custom_call.1} parent=11 // pred_check
          %p160 = pneg %p47
        $region14: #{tpu_custom_call.1} parent=11 // pred_check_branch
          %162 = sbr.rel (%p160) target = $region16
        $region15: #{tpu_custom_call.1} parent=11 // pred_region
          _
        $region16: #{tpu_custom_call.1} parent=11 // pred_fallthru
          _
        // Predicated region
        $region17: #{tpu_custom_call.1} parent=11 // pred_check
          %p163 = pneg %p96
        $region18: #{tpu_custom_call.1} parent=11 // pred_check_branch
          %165 = sbr.rel (%p163) target = $region20
        $region19: #{tpu_custom_call.1} parent=11 // pred_region
          _
        $region20: #{tpu_custom_call.1} parent=11 // pred_fallthru
          _
        // Predicated region
        $region21: #{tpu_custom_call.1} parent=11 // pred_check
          %p166 = pneg %p117
        $region22: #{tpu_custom_call.1} parent=11 // pred_check_branch
          %168 = sbr.rel (%p166) target = $region24
        $region23: #{tpu_custom_call.1} parent=11 // pred_region
          _
        $region24: #{tpu_custom_call.1} parent=11 // pred_fallthru
          _
      $region12: #{tpu_custom_call.1} parent=5 // pred_fallthru
        _
      %p169 = scmp.lt.s32.totalorder %s14, 4
      // Predicated region
      $region25: #{tpu_custom_call.1} parent=5 // pred_check
        %p170 = pneg %p169
      $region26: #{tpu_custom_call.1} parent=5 // pred_check_branch
        %172 = sbr.rel (%p170) target = $region28
      $region27: #{tpu_custom_call.1} parent=5 // pred_region
        // Predicated region
        $region29: #{tpu_custom_call.1} parent=27 // pred_check
          %p173 = pneg %p69
        $region30: #{tpu_custom_call.1} parent=27 // pred_check_branch
          %175 = sbr.rel (%p173) target = $region32
        $region31: #{tpu_custom_call.1} parent=27 // pred_region
          %p176 = scmp.lt.s32.totalorder %s21, 1
          %s177 = scalar_select %p176, %s21, 1
          %p178 = scmp.lt.s32.totalorder %s22, 1
          %s179 = scalar_select %p178, %s22, 1
          %s180 = smul.addr %s179, 30
          %s181 = smul.addr %s177, 60
          %s182 = sadd.s32 %s180, %s181
          %s183 = smul.addr %s182, 4
          %s184 = scalar_lea.vmem %s1, %s183
        $region32: #{tpu_custom_call.1} parent=27 // pred_fallthru
          _
      $region28: #{tpu_custom_call.1} parent=5 // pred_fallthru
        _
      %p185 = scmp.le.s32.totalorder 1, %s14
      %p186 = scmp.lt.s32.totalorder %s14, 5
      %p187 = pnand %p185, %p186
      %p188 = pneg %p187
      // Predicated region
      $region33: #{tpu_custom_call.1} parent=5 // pred_check
        _
      $region34: #{tpu_custom_call.1} parent=5 // pred_check_branch
        %190 = sbr.rel (%p187) target = $region36
      $region35: #{tpu_custom_call.1} parent=5 // pred_region
        %s191 = ssub.s32 %s14, 1
        %p192 = pneg %p47
        %p193 = pneg %p44
        %p194 = scmp.lt.s32.totalorder %s23, 1
        %s195 = scalar_select %p194, %s23, 1
        %p196 = scmp.lt.s32.totalorder %s24, 1
        %s197 = scalar_select %p196, %s24, 1
        %s198 = smul.addr %s197, 30
        %s199 = smul.addr %s195, 60
        %s200 = sadd.s32 %s198, %s199
        %s201 = smul.addr %s200, 4
        %s202 = scalar_lea.vmem %s1, %s201
        %p203 = pneg %p75
        %p204 = pneg %p72
        %p205 = pneg %p96
        %p206 = pneg %p93
        %p207 = pneg %p117
        %p208 = pneg %p114
        %p209 = pneg %p145
        %p210 = pneg %p142
        %s211 = sand.u32 %s132, 1
        %s212 = scalar_lea.sflag [#allocation4], %s211
        %s213 = sand.u32 %s132, 1
        %s214 = smul.addr %s213, 128
        %s215 = scalar_lea.vmem [#allocation3], %s214
        %p216 = scmp.lt.s32.totalorder %s23, 1
        %s217 = scalar_select %p216, %s23, 1
        %p218 = scmp.lt.s32.totalorder %s24, 1
        %s219 = scalar_select %p218, %s24, 1
        %s220 = smul.addr %s219, 30
        %s221 = smul.addr %s217, 60
        %s222 = sadd.s32 %s220, %s221
        %s223 = smul.addr %s222, 4
        %s224 = scalar_lea.vmem %s1, %s223
        %v226 = vld [vmem:[%s3] sm:$0x1]
        %v228 = vlaneseq
        %v229 = vshrl.u32 %v228, 7
        %v230 = vsub.s32 0, %v229
        %v231 = vrot.slane %v226, %v230
        %v233 = vld [vmem:[%s224] sm:$0xf]
        %v234 = vld [vmem:[%s224 + $0x4] sm:$0xf]
        %v235 = vld [vmem:[%s224 + $0xc] sm:$0xf]
        %v236 = vld [vmem:[%s224 + $0x10] sm:$0xf]
        %v237 = vld [vmem:[%s224 + $0x18] sm:$0xf]
        %v238 = vld [vmem:[%s224 + $0x1c] sm:$0xf]
        %v239 = vld [vmem:[%s224 + $0x24] sm:$0xf]
        %v240 = vld [vmem:[%s224 + $0x28] sm:$0xf]
        %v241 = vld [vmem:[%s224 + $0x30] sm:$0xf]
        %v242 = vld [vmem:[%s224 + $0x34] sm:$0xf]
        %v243 = vld [vmem:[%s224 + $0x3c] sm:$0xf]
        %v244 = vld [vmem:[%s224 + $0x40] sm:$0xf]
        %v245 = vld [vmem:[%s224 + $0x48] sm:$0xf]
        %v246 = vld [vmem:[%s224 + $0x4c] sm:$0xf]
        %v247 = vld [vmem:[%s224 + $0x54] sm:$0xf]
        %v248 = vld [vmem:[%s224 + $0x58] sm:$0xf]
        %v249 = vld [vmem:[%s2] sm:$0xf]
        %v250 = vld [vmem:[%s2 + $0x4] sm:$0xf]
        %v251 = vld [vmem:[%s2 + $0x8] sm:$0xf]
        %v252 = vld [vmem:[%s2 + $0xc] sm:$0xf]
        %v269 = vunpack.c.l.b16 %v233
        %v270 = vunpack.c.l.b16 %v234
        %v271 = vunpack.c.l.b16 %v235
        %v272 = vunpack.c.l.b16 %v236
        %v273 = vunpack.c.l.b16 %v237
        %v274 = vunpack.c.l.b16 %v238
        %v275 = vunpack.c.l.b16 %v239
        %v276 = vunpack.c.l.b16 %v240
        %v277 = vunpack.c.l.b16 %v241
        %v278 = vunpack.c.l.b16 %v242
        %v279 = vunpack.c.l.b16 %v243
        %v280 = vunpack.c.l.b16 %v244
        %v281 = vunpack.c.l.b16 %v245
        %v282 = vunpack.c.l.b16 %v246
        %v283 = vunpack.c.l.b16 %v247
        %v284 = vunpack.c.l.b16 %v248
        %v285 = vpack.c.b16 %v270, %v269
        %v286 = vpack.c.b16 %v272, %v271
        %v287 = vpack.c.b16 %v274, %v273
        %v288 = vpack.c.b16 %v276, %v275
        %v289 = vpack.c.b16 %v278, %v277
        %v290 = vpack.c.b16 %v280, %v279
        %v291 = vpack.c.b16 %v282, %v281
        %v292 = vpack.c.b16 %v284, %v283
        %v297 = vunpack.c.l.b16 %v249
        %v298 = vunpack.c.l.b16 %v250
        %v299 = vunpack.c.l.b16 %v251
        %v300 = vunpack.c.l.b16 %v252
        %v301 = vpack.c.b16 %v298, %v297
        %v302 = vpack.c.b16 %v300, %v299
        %vm305 = vcmask 261120
        %v307 = vsel %vm305, %v285, 0
        %v310 = vsel %vm305, %v286, 0
        %v313 = vsel %vm305, %v287, 0
        %v316 = vsel %vm305, %v288, 0
        %v319 = vsel %vm305, %v289, 0
        %v322 = vsel %vm305, %v290, 0
        %v325 = vsel %vm305, %v291, 0
        %v328 = vsel %vm305, %v292, 0
        %330 = vmatprep.subr.bf16.mxu0 0
        %331 = vmatpush1.bf16.msra.mxu0 %v301
        %332 = vmatprep.subr.bf16.mxu0 0
        %333 = vmatpush1.bf16.msra.mxu0 %v302
        %334 = vmatprep.subr.bf16.mxu0 0
        %335 = vmatpush1.bf16.msra.mxu0 0
        %336 = vmatprep.subr.bf16.mxu0 0
        %337 = vmatpush1.bf16.msra.mxu0 0
        %338 = vmatprep.subr.bf16.mxu0 0
        %339 = vmatpush1.bf16.msra.mxu0 0
        %340 = vmatprep.subr.bf16.mxu0 0
        %341 = vmatpush1.bf16.msra.mxu0 0
        %342 = vmatprep.subr.bf16.mxu0 0
        %343 = vmatpush1.bf16.msra.mxu0 0
        %344 = vmatprep.subr.bf16.mxu0 0
        %345 = vmatpush1.bf16.msra.mxu0 0
        %346 = vmatprep.subr.bf16.mxu0 0
        %347 = vmatpush1.bf16.msra.mxu0 0
        %348 = vmatprep.subr.bf16.mxu0 0
        %349 = vmatpush1.bf16.msra.mxu0 0
        %350 = vmatprep.subr.bf16.mxu0 0
        %351 = vmatpush1.bf16.msra.mxu0 0
        %352 = vmatprep.subr.bf16.mxu0 0
        %353 = vmatpush1.bf16.msra.mxu0 0
        %354 = vmatprep.subr.bf16.mxu0 0
        %355 = vmatpush1.bf16.msra.mxu0 0
        %356 = vmatprep.subr.bf16.mxu0 0
        %357 = vmatpush1.bf16.msra.mxu0 0
        %358 = vmatprep.subr.bf16.mxu0 0
        %359 = vmatpush1.bf16.msra.mxu0 0
        %360 = vmatprep.subr.bf16.mxu0 0
        %361 = vmatpush1.bf16.msra.mxu0 0
        %362 = vmatprep.mubr.bf16.mxu0 0
        %363 = vmatmul.mubr.bf16.gmra.mrb[0].mxu0 %v307
        %v364 = vpop.f32.mrb[0].mxu0
        %v365 = vadd.f32 0.0, %v364
        %v366 = vpop.f32.mrb[0].mxu0
        %v367 = vpop.f32.mrb[0].mxu0
        %v368 = vadd.f32 0.0, %v367
        %v369 = vpop.f32.mrb[0].mxu0
        %370 = vmatprep.mubr.bf16.mxu0 0
        %371 = vmatmul.mubr.bf16.gmra.mrb[0].mxu0 %v310
        %v372 = vpop.f32.mrb[0].mxu0
        %v373 = vadd.f32 0.0, %v372
        %v374 = vpop.f32.mrb[0].mxu0
        %v375 = vpop.f32.mrb[0].mxu0
        %v376 = vadd.f32 0.0, %v375
        %v377 = vpop.f32.mrb[0].mxu0
        %378 = vmatprep.mubr.bf16.mxu0 0
        %379 = vmatmul.mubr.bf16.gmra.mrb[0].mxu0 %v313
        %v380 = vpop.f32.mrb[0].mxu0
        %v381 = vadd.f32 0.0, %v380
        %v382 = vpop.f32.mrb[0].mxu0
        %v383 = vpop.f32.mrb[0].mxu0
        %v384 = vadd.f32 0.0, %v383
        %v385 = vpop.f32.mrb[0].mxu0
        %386 = vmatprep.mubr.bf16.mxu0 0
        %387 = vmatmul.mubr.bf16.gmra.mrb[0].mxu0 %v316
        %v388 = vpop.f32.mrb[0].mxu0
        %v389 = vadd.f32 0.0, %v388
        %v390 = vpop.f32.mrb[0].mxu0
        %v391 = vpop.f32.mrb[0].mxu0
        %v392 = vadd.f32 0.0, %v391
        %v393 = vpop.f32.mrb[0].mxu0
        %394 = vmatprep.mubr.bf16.mxu0 0
        %395 = vmatmul.mubr.bf16.gmra.mrb[0].mxu0 %v319
        %v396 = vpop.f32.mrb[0].mxu0
        %v397 = vadd.f32 0.0, %v396
        %v398 = vpop.f32.mrb[0].mxu0
        %v399 = vpop.f32.mrb[0].mxu0
        %v400 = vadd.f32 0.0, %v399
        %v401 = vpop.f32.mrb[0].mxu0
        %402 = vmatprep.mubr.bf16.mxu0 0
        %403 = vmatmul.mubr.bf16.gmra.mrb[0].mxu0 %v322
        %v404 = vpop.f32.mrb[0].mxu0
        %v405 = vadd.f32 0.0, %v404
        %v406 = vpop.f32.mrb[0].mxu0
        %v407 = vpop.f32.mrb[0].mxu0
        %v408 = vadd.f32 0.0, %v407
        %v409 = vpop.f32.mrb[0].mxu0
        %410 = vmatprep.mubr.bf16.mxu0 0
        %411 = vmatmul.mubr.bf16.gmra.mrb[0].mxu0 %v325
        %v412 = vpop.f32.mrb[0].mxu0
        %v413 = vadd.f32 0.0, %v412
        %v414 = vpop.f32.mrb[0].mxu0
        %v415 = vpop.f32.mrb[0].mxu0
        %v416 = vadd.f32 0.0, %v415
        %v417 = vpop.f32.mrb[0].mxu0
        %418 = vmatprep.mubr.bf16.mxu0 0
        %419 = vmatmul.mubr.bf16.gmra.mrb[0].mxu0 %v328
        %v420 = vpop.f32.mrb[0].mxu0
        %v421 = vadd.f32 0.0, %v420
        %v422 = vpop.f32.mrb[0].mxu0
        %v423 = vpop.f32.mrb[0].mxu0
        %v424 = vadd.f32 0.0, %v423
        %v425 = vpop.f32.mrb[0].mxu0
        %426 = vdwg.mxu0
        %v427 = vadd.f32 %v231, %v365
        %v428 = vadd.f32 %v231, %v368
        %v429 = vadd.f32 %v231, %v373
        %v430 = vadd.f32 %v231, %v376
        %v431 = vadd.f32 %v231, %v381
        %v432 = vadd.f32 %v231, %v384
        %v433 = vadd.f32 %v231, %v389
        %v434 = vadd.f32 %v231, %v392
        %v435 = vadd.f32 %v231, %v397
        %v436 = vadd.f32 %v231, %v400
        %v437 = vadd.f32 %v231, %v405
        %v438 = vadd.f32 %v231, %v408
        %v439 = vadd.f32 %v231, %v413
        %v440 = vadd.f32 %v231, %v416
        %v441 = vadd.f32 %v231, %v421
        %v442 = vadd.f32 %v231, %v424
        %v443 = vld [vmem:[%s224] sm:$0xf]
        %v444 = vld [vmem:[%s224 + $0x4] sm:$0xf]
        %v445 = vld [vmem:[%s224 + $0x8] sm:$0x1]
        %v446 = vld [vmem:[%s224 + $0xc] sm:$0xf]
        %v447 = vld [vmem:[%s224 + $0x10] sm:$0xf]
        %v448 = vld [vmem:[%s224 + $0x14] sm:$0x1]
        %v449 = vld [vmem:[%s224 + $0x18] sm:$0xf]
        %v450 = vld [vmem:[%s224 + $0x1c] sm:$0xf]
        %v451 = vld [vmem:[%s224 + $0x20] sm:$0x1]
        %v452 = vld [vmem:[%s224 + $0x24] sm:$0xf]
        %v453 = vld [vmem:[%s224 + $0x28] sm:$0xf]
        %v454 = vld [vmem:[%s224 + $0x2c] sm:$0x1]
        %v455 = vld [vmem:[%s224 + $0x30] sm:$0xf]
        %v456 = vld [vmem:[%s224 + $0x34] sm:$0xf]
        %v457 = vld [vmem:[%s224 + $0x38] sm:$0x1]
        %v458 = vld [vmem:[%s224 + $0x3c] sm:$0xf]
        %v459 = vld [vmem:[%s224 + $0x40] sm:$0xf]
        %v460 = vld [vmem:[%s224 + $0x44] sm:$0x1]
        %v461 = vld [vmem:[%s224 + $0x48] sm:$0xf]
        %v462 = vld [vmem:[%s224 + $0x4c] sm:$0xf]
        %v463 = vld [vmem:[%s224 + $0x50] sm:$0x1]
        %v464 = vld [vmem:[%s224 + $0x54] sm:$0xf]
        %v465 = vld [vmem:[%s224 + $0x58] sm:$0xf]
        %v466 = vld [vmem:[%s224 + $0x5c] sm:$0x1]
        %vm467 = vsmask.f32 3328
        %vm468 = vsmask.f32 7440
        %vm469 = vmor %vm467, %vm468
        %v471 = vshrl.u32 %v443, 16
        %v473 = vrot.slane %v471, 4
        %v474 = vshll.u32 %v443, 16
        %v476 = vrot.slane %v474, 5
        %v477 = vor.u32 %v473, %v476
        %v478 = vrot.slane %v477, 4
        %v480 = vshll.u32 %v444, 16
        %v482 = vrot.slane %v480, 5
        %v483 = vsel %vm469, %v478, %v482
        %v484 = vshrl.u32 %v444, 16
        %v486 = vrot.slane %v484, 4
        %v487 = vor.u32 %v486, %v482
        %v488 = vrot.slane %v487, 4
        %v490 = vshll.u32 %v445, 16
        %v492 = vrot.slane %v490, 5
        %v493 = vsel %vm469, %v488, %v492
        %v495 = vshrl.u32 %v446, 16
        %v497 = vrot.slane %v495, 4
        %v498 = vshll.u32 %v446, 16
        %v500 = vrot.slane %v498, 5
        %v501 = vor.u32 %v497, %v500
        %v502 = vrot.slane %v501, 4
        %v504 = vshll.u32 %v447, 16
        %v506 = vrot.slane %v504, 5
        %v507 = vsel %vm469, %v502, %v506
        %v508 = vshrl.u32 %v447, 16
        %v510 = vrot.slane %v508, 4
        %v511 = vor.u32 %v510, %v506
        %v512 = vrot.slane %v511, 4
        %v514 = vshll.u32 %v448, 16
        %v516 = vrot.slane %v514, 5
        %v517 = vsel %vm469, %v512, %v516
        %v519 = vshrl.u32 %v449, 16
        %v521 = vrot.slane %v519, 4
        %v522 = vshll.u32 %v449, 16
        %v524 = vrot.slane %v522, 5
        %v525 = vor.u32 %v521, %v524
        %v526 = vrot.slane %v525, 4
        %v528 = vshll.u32 %v450, 16
        %v530 = vrot.slane %v528, 5
        %v531 = vsel %vm469, %v526, %v530
        %v532 = vshrl.u32 %v450, 16
        %v534 = vrot.slane %v532, 4
        %v535 = vor.u32 %v534, %v530
        %v536 = vrot.slane %v535, 4
        %v538 = vshll.u32 %v451, 16
        %v540 = vrot.slane %v538, 5
        %v541 = vsel %vm469, %v536, %v540
        %v543 = vshrl.u32 %v452, 16
        %v545 = vrot.slane %v543, 4
        %v546 = vshll.u32 %v452, 16
        %v548 = vrot.slane %v546, 5
        %v549 = vor.u32 %v545, %v548
        %v550 = vrot.slane %v549, 4
        %v552 = vshll.u32 %v453, 16
        %v554 = vrot.slane %v552, 5
        %v555 = vsel %vm469, %v550, %v554
        %v556 = vshrl.u32 %v453, 16
        %v558 = vrot.slane %v556, 4
        %v559 = vor.u32 %v558, %v554
        %v560 = vrot.slane %v559, 4
        %v562 = vshll.u32 %v454, 16
        %v564 = vrot.slane %v562, 5
        %v565 = vsel %vm469, %v560, %v564
        %v567 = vshrl.u32 %v455, 16
        %v569 = vrot.slane %v567, 4
        %v570 = vshll.u32 %v455, 16
        %v572 = vrot.slane %v570, 5
        %v573 = vor.u32 %v569, %v572
        %v574 = vrot.slane %v573, 4
        %v576 = vshll.u32 %v456, 16
        %v578 = vrot.slane %v576, 5
        %v579 = vsel %vm469, %v574, %v578
        %v580 = vshrl.u32 %v456, 16
        %v582 = vrot.slane %v580, 4
        %v583 = vor.u32 %v582, %v578
        %v584 = vrot.slane %v583, 4
        %v586 = vshll.u32 %v457, 16
        %v588 = vrot.slane %v586, 5
        %v589 = vsel %vm469, %v584, %v588
        %v591 = vshrl.u32 %v458, 16
        %v593 = vrot.slane %v591, 4
        %v594 = vshll.u32 %v458, 16
        %v596 = vrot.slane %v594, 5
        %v597 = vor.u32 %v593, %v596
        %v598 = vrot.slane %v597, 4
        %v600 = vshll.u32 %v459, 16
        %v602 = vrot.slane %v600, 5
        %v603 = vsel %vm469, %v598, %v602
        %v604 = vshrl.u32 %v459, 16
        %v606 = vrot.slane %v604, 4
        %v607 = vor.u32 %v606, %v602
        %v608 = vrot.slane %v607, 4
        %v610 = vshll.u32 %v460, 16
        %v612 = vrot.slane %v610, 5
        %v613 = vsel %vm469, %v608, %v612
        %v615 = vshrl.u32 %v461, 16
        %v617 = vrot.slane %v615, 4
        %v618 = vshll.u32 %v461, 16
        %v620 = vrot.slane %v618, 5
        %v621 = vor.u32 %v617, %v620
        %v622 = vrot.slane %v621, 4
        %v624 = vshll.u32 %v462, 16
        %v626 = vrot.slane %v624, 5
        %v627 = vsel %vm469, %v622, %v626
        %v628 = vshrl.u32 %v462, 16
        %v630 = vrot.slane %v628, 4
        %v631 = vor.u32 %v630, %v626
        %v632 = vrot.slane %v631, 4
        %v634 = vshll.u32 %v463, 16
        %v636 = vrot.slane %v634, 5
        %v637 = vsel %vm469, %v632, %v636
        %v639 = vshrl.u32 %v464, 16
        %v641 = vrot.slane %v639, 4
        %v642 = vshll.u32 %v464, 16
        %v644 = vrot.slane %v642, 5
        %v645 = vor.u32 %v641, %v644
        %v646 = vrot.slane %v645, 4
        %v648 = vshll.u32 %v465, 16
        %v650 = vrot.slane %v648, 5
        %v651 = vsel %vm469, %v646, %v650
        %v652 = vshrl.u32 %v465, 16
        %v654 = vrot.slane %v652, 4
        %v655 = vor.u32 %v654, %v650
        %v656 = vrot.slane %v655, 4
        %v658 = vshll.u32 %v466, 16
        %v660 = vrot.slane %v658, 5
        %v661 = vsel %vm469, %v656, %v660
        %s662 = scalar_lea.vmem %s2, 16
        %v663 = vld [vmem:[%s662] sm:$0xf]
        %v664 = vld [vmem:[%s662 + $0x4] sm:$0xf]
        %v665 = vld [vmem:[%s662 + $0x8] sm:$0xf]
        %v666 = vld [vmem:[%s662 + $0xc] sm:$0xf]
        %v667 = vunpack.c.l.b16 %v483
        %v668 = vunpack.c.l.b16 %v493
        %v669 = vunpack.c.l.b16 %v507
        %v670 = vunpack.c.l.b16 %v517
        %v671 = vunpack.c.l.b16 %v531
        %v672 = vunpack.c.l.b16 %v541
        %v673 = vunpack.c.l.b16 %v555
        %v674 = vunpack.c.l.b16 %v565
        %v675 = vunpack.c.l.b16 %v579
        %v676 = vunpack.c.l.b16 %v589
        %v677 = vunpack.c.l.b16 %v603
        %v678 = vunpack.c.l.b16 %v613
        %v679 = vunpack.c.l.b16 %v627
        %v680 = vunpack.c.l.b16 %v637
        %v681 = vunpack.c.l.b16 %v651
        %v682 = vunpack.c.l.b16 %v661
        %v683 = vpack.c.b16 %v668, %v667
        %v684 = vpack.c.b16 %v670, %v669
        %v685 = vpack.c.b16 %v672, %v671
        %v686 = vpack.c.b16 %v674, %v673
        %v687 = vpack.c.b16 %v676, %v675
        %v688 = vpack.c.b16 %v678, %v677
        %v689 = vpack.c.b16 %v680, %v679
        %v690 = vpack.c.b16 %v682, %v681
        %v695 = vunpack.c.l.b16 %v663
        %v696 = vunpack.c.l.b16 %v664
        %v697 = vunpack.c.l.b16 %v665
        %v698 = vunpack.c.l.b16 %v666
        %v699 = vpack.c.b16 %v696, %v695
        %v700 = vpack.c.b16 %v698, %v697
        %v704 = vsel %vm305, %v683, 0
        %v707 = vsel %vm305, %v684, 0
        %v710 = vsel %vm305, %v685, 0
        %v713 = vsel %vm305, %v686, 0
        %v716 = vsel %vm305, %v687, 0
        %v719 = vsel %vm305, %v688, 0
        %v722 = vsel %vm305, %v689, 0
        %v725 = vsel %vm305, %v690, 0
        %727 = vmatprep.subr.bf16.mxu0 0
        %728 = vmatpush1.bf16.msra.mxu0 %v699
        %729 = vmatprep.subr.bf16.mxu0 0
        %730 = vmatpush1.bf16.msra.mxu0 %v700
        %731 = vmatprep.subr.bf16.mxu0 0
        %732 = vmatpush1.bf16.msra.mxu0 0
        %733 = vmatprep.subr.bf16.mxu0 0
        %734 = vmatpush1.bf16.msra.mxu0 0
        %735 = vmatprep.subr.bf16.mxu0 0
        %736 = vmatpush1.bf16.msra.mxu0 0
        %737 = vmatprep.subr.bf16.mxu0 0
        %738 = vmatpush1.bf16.msra.mxu0 0
        %739 = vmatprep.subr.bf16.mxu0 0
        %740 = vmatpush1.bf16.msra.mxu0 0
        %741 = vmatprep.subr.bf16.mxu0 0
        %742 = vmatpush1.bf16.msra.mxu0 0
        %743 = vmatprep.subr.bf16.mxu0 0
        %744 = vmatpush1.bf16.msra.mxu0 0
        %745 = vmatprep.subr.bf16.mxu0 0
        %746 = vmatpush1.bf16.msra.mxu0 0
        %747 = vmatprep.subr.bf16.mxu0 0
        %748 = vmatpush1.bf16.msra.mxu0 0
        %749 = vmatprep.subr.bf16.mxu0 0
        %750 = vmatpush1.bf16.msra.mxu0 0
        %751 = vmatprep.subr.bf16.mxu0 0
        %752 = vmatpush1.bf16.msra.mxu0 0
        %753 = vmatprep.subr.bf16.mxu0 0
        %754 = vmatpush1.bf16.msra.mxu0 0
        %755 = vmatprep.subr.bf16.mxu0 0
        %756 = vmatpush1.bf16.msra.mxu0 0
        %757 = vmatprep.subr.bf16.mxu0 0
        %758 = vmatpush1.bf16.msra.mxu0 0
        %759 = vmatprep.mubr.bf16.mxu0 0
        %760 = vmatmul.mubr.bf16.gmra.mrb[0].mxu0 %v704
        %v761 = vpop.f32.mrb[0].mxu0
        %v762 = vadd.f32 0.0, %v761
        %v763 = vpop.f32.mrb[0].mxu0
        %v764 = vpop.f32.mrb[0].mxu0
        %v765 = vadd.f32 0.0, %v764
        %v766 = vpop.f32.mrb[0].mxu0
        %767 = vmatprep.mubr.bf16.mxu0 0
        %768 = vmatmul.mubr.bf16.gmra.mrb[0].mxu0 %v707
        %v769 = vpop.f32.mrb[0].mxu0
        %v770 = vadd.f32 0.0, %v769
        %v771 = vpop.f32.mrb[0].mxu0
        %v772 = vpop.f32.mrb[0].mxu0
        %v773 = vadd.f32 0.0, %v772
        %v774 = vpop.f32.mrb[0].mxu0
        %775 = vmatprep.mubr.bf16.mxu0 0
        %776 = vmatmul.mubr.bf16.gmra.mrb[0].mxu0 %v710
        %v777 = vpop.f32.mrb[0].mxu0
        %v778 = vadd.f32 0.0, %v777
        %v779 = vpop.f32.mrb[0].mxu0
        %v780 = vpop.f32.mrb[0].mxu0
        %v781 = vadd.f32 0.0, %v780
        %v782 = vpop.f32.mrb[0].mxu0
        %783 = vmatprep.mubr.bf16.mxu0 0
        %784 = vmatmul.mubr.bf16.gmra.mrb[0].mxu0 %v713
        %v785 = vpop.f32.mrb[0].mxu0
        %v786 = vadd.f32 0.0, %v785
        %v787 = vpop.f32.mrb[0].mxu0
        %v788 = vpop.f32.mrb[0].mxu0
        %v789 = vadd.f32 0.0, %v788
        %v790 = vpop.f32.mrb[0].mxu0
        %791 = vmatprep.mubr.bf16.mxu0 0
        %792 = vmatmul.mubr.bf16.gmra.mrb[0].mxu0 %v716
        %v793 = vpop.f32.mrb[0].mxu0
        %v794 = vadd.f32 0.0, %v793
        %v795 = vpop.f32.mrb[0].mxu0
        %v796 = vpop.f32.mrb[0].mxu0
        %v797 = vadd.f32 0.0, %v796
        %v798 = vpop.f32.mrb[0].mxu0
        %799 = vmatprep.mubr.bf16.mxu0 0
        %800 = vmatmul.mubr.bf16.gmra.mrb[0].mxu0 %v719
        %v801 = vpop.f32.mrb[0].mxu0
        %v802 = vadd.f32 0.0, %v801
        %v803 = vpop.f32.mrb[0].mxu0
        %v804 = vpop.f32.mrb[0].mxu0
        %v805 = vadd.f32 0.0, %v804
        %v806 = vpop.f32.mrb[0].mxu0
        %807 = vmatprep.mubr.bf16.mxu0 0
        %808 = vmatmul.mubr.bf16.gmra.mrb[0].mxu0 %v722
        %v809 = vpop.f32.mrb[0].mxu0
        %v810 = vadd.f32 0.0, %v809
        %v811 = vpop.f32.mrb[0].mxu0
        %v812 = vpop.f32.mrb[0].mxu0
        %v813 = vadd.f32 0.0, %v812
        %v814 = vpop.f32.mrb[0].mxu0
        %815 = vmatprep.mubr.bf16.mxu0 0
        %816 = vmatmul.mubr.bf16.gmra.mrb[0].mxu0 %v725
        %v817 = vpop.f32.mrb[0].mxu0
        %v818 = vadd.f32 0.0, %v817
        %v819 = vpop.f32.mrb[0].mxu0
        %v820 = vpop.f32.mrb[0].mxu0
        %v821 = vadd.f32 0.0, %v820
        %v822 = vpop.f32.mrb[0].mxu0
        %823 = vdwg.mxu0
        %v824 = vadd.f32 %v427, %v762
        %v825 = vadd.f32 %v428, %v765
        %v826 = vadd.f32 %v429, %v770
        %v827 = vadd.f32 %v430, %v773
        %v828 = vadd.f32 %v431, %v778
        %v829 = vadd.f32 %v432, %v781
        %v830 = vadd.f32 %v433, %v786
        %v831 = vadd.f32 %v434, %v789
        %v832 = vadd.f32 %v435, %v794
        %v833 = vadd.f32 %v436, %v797
        %v834 = vadd.f32 %v437, %v802
        %v835 = vadd.f32 %v438, %v805
        %v836 = vadd.f32 %v439, %v810
        %v837 = vadd.f32 %v440, %v813
        %v838 = vadd.f32 %v441, %v818
        %v839 = vadd.f32 %v442, %v821
        %v840 = vld [vmem:[%s224] sm:$0xe]
        %v841 = vld [vmem:[%s224 + $0xc] sm:$0xe]
        %v842 = vld [vmem:[%s224 + $0x18] sm:$0xe]
        %v843 = vld [vmem:[%s224 + $0x24] sm:$0xe]
        %v844 = vld [vmem:[%s224 + $0x30] sm:$0xe]
        %v845 = vld [vmem:[%s224 + $0x3c] sm:$0xe]
        %v846 = vld [vmem:[%s224 + $0x48] sm:$0xe]
        %v847 = vld [vmem:[%s224 + $0x54] sm:$0xe]
        %vm872 = vcmask 1042432
        %vm873 = vcmask 1046532
        %vm874 = vmor %vm872, %vm873
        %v875 = vrot.slane %v840, 5
        %v876 = vrot.slane %v875, 4
        %v877 = vrot.slane %v444, 5
        %v878 = vsel %vm874, %v876, %v877
        %v879 = vrot.slane %v877, 4
        %v880 = vrot.slane %v445, 5
        %v881 = vsel %vm874, %v879, %v880
        %v882 = vrot.slane %v841, 5
        %v883 = vrot.slane %v882, 4
        %v884 = vrot.slane %v447, 5
        %v885 = vsel %vm874, %v883, %v884
        %v886 = vrot.slane %v884, 4
        %v887 = vrot.slane %v448, 5
        %v888 = vsel %vm874, %v886, %v887
        %v889 = vrot.slane %v842, 5
        %v890 = vrot.slane %v889, 4
        %v891 = vrot.slane %v450, 5
        %v892 = vsel %vm874, %v890, %v891
        %v893 = vrot.slane %v891, 4
        %v894 = vrot.slane %v451, 5
        %v895 = vsel %vm874, %v893, %v894
        %v896 = vrot.slane %v843, 5
        %v897 = vrot.slane %v896, 4
        %v898 = vrot.slane %v453, 5
        %v899 = vsel %vm874, %v897, %v898
        %v900 = vrot.slane %v898, 4
        %v901 = vrot.slane %v454, 5
        %v902 = vsel %vm874, %v900, %v901
        %v903 = vrot.slane %v844, 5
        %v904 = vrot.slane %v903, 4
        %v905 = vrot.slane %v456, 5
        %v906 = vsel %vm874, %v904, %v905
        %v907 = vrot.slane %v905, 4
        %v908 = vrot.slane %v457, 5
        %v909 = vsel %vm874, %v907, %v908
        %v910 = vrot.slane %v845, 5
        %v911 = vrot.slane %v910, 4
        %v912 = vrot.slane %v459, 5
        %v913 = vsel %vm874, %v911, %v912
        %v914 = vrot.slane %v912, 4
        %v915 = vrot.slane %v460, 5
        %v916 = vsel %vm874, %v914, %v915
        %v917 = vrot.slane %v846, 5
        %v918 = vrot.slane %v917, 4
        %v919 = vrot.slane %v462, 5
        %v920 = vsel %vm874, %v918, %v919
        %v921 = vrot.slane %v919, 4
        %v922 = vrot.slane %v463, 5
        %v923 = vsel %vm874, %v921, %v922
        %v924 = vrot.slane %v847, 5
        %v925 = vrot.slane %v924, 4
        %v926 = vrot.slane %v465, 5
        %v927 = vsel %vm874, %v925, %v926
        %v928 = vrot.slane %v926, 4
        %v929 = vrot.slane %v466, 5
        %v930 = vsel %vm874, %v928, %v929
        %s931 = scalar_lea.vmem %s2, 32
        %v932 = vld [vmem:[%s931] sm:$0xf]
        %v933 = vld [vmem:[%s931 + $0x4] sm:$0xf]
        %v934 = vld [vmem:[%s931 + $0x8] sm:$0xf]
        %v935 = vld [vmem:[%s931 + $0xc] sm:$0xf]
        %v936 = vunpack.c.l.b16 %v878
        %v937 = vunpack.c.l.b16 %v881
        %v938 = vunpack.c.l.b16 %v885
        %v939 = vunpack.c.l.b16 %v888
        %v940 = vunpack.c.l.b16 %v892
        %v941 = vunpack.c.l.b16 %v895
        %v942 = vunpack.c.l.b16 %v899
        %v943 = vunpack.c.l.b16 %v902
        %v944 = vunpack.c.l.b16 %v906
        %v945 = vunpack.c.l.b16 %v909
        %v946 = vunpack.c.l.b16 %v913
        %v947 = vunpack.c.l.b16 %v916
        %v948 = vunpack.c.l.b16 %v920
        %v949 = vunpack.c.l.b16 %v923
        %v950 = vunpack.c.l.b16 %v927
        %v951 = vunpack.c.l.b16 %v930
        %v952 = vpack.c.b16 %v937, %v936
        %v953 = vpack.c.b16 %v939, %v938
        %v954 = vpack.c.b16 %v941, %v940
        %v955 = vpack.c.b16 %v943, %v942
        %v956 = vpack.c.b16 %v945, %v944
        %v957 = vpack.c.b16 %v947, %v946
        %v958 = vpack.c.b16 %v949, %v948
        %v959 = vpack.c.b16 %v951, %v950
        %v964 = vunpack.c.l.b16 %v932
        %v965 = vunpack.c.l.b16 %v933
        %v966 = vunpack.c.l.b16 %v934
        %v967 = vunpack.c.l.b16 %v935
        %v968 = vpack.c.b16 %v965, %v964
        %v969 = vpack.c.b16 %v967, %v966
        %v973 = vsel %vm305, %v952, 0
        %v976 = vsel %vm305, %v953, 0
        %v979 = vsel %vm305, %v954, 0
        %v982 = vsel %vm305, %v955, 0
        %v985 = vsel %vm305, %v956, 0
        %v988 = vsel %vm305, %v957, 0
        %v991 = vsel %vm305, %v958, 0
        %v994 = vsel %vm305, %v959, 0
        %996 = vmatprep.subr.bf16.mxu0 0
        %997 = vmatpush1.bf16.msra.mxu0 %v968
        %998 = vmatprep.subr.bf16.mxu0 0
        %999 = vmatpush1.bf16.msra.mxu0 %v969
        %1000 = vmatprep.subr.bf16.mxu0 0
        %1001 = vmatpush1.bf16.msra.mxu0 0
        %1002 = vmatprep.subr.bf16.mxu0 0
        %1003 = vmatpush1.bf16.msra.mxu0 0
        %1004 = vmatprep.subr.bf16.mxu0 0
        %1005 = vmatpush1.bf16.msra.mxu0 0
        %1006 = vmatprep.subr.bf16.mxu0 0
        %1007 = vmatpush1.bf16.msra.mxu0 0
        %1008 = vmatprep.subr.bf16.mxu0 0
        %1009 = vmatpush1.bf16.msra.mxu0 0
        %1010 = vmatprep.subr.bf16.mxu0 0
        %1011 = vmatpush1.bf16.msra.mxu0 0
        %1012 = vmatprep.subr.bf16.mxu0 0
        %1013 = vmatpush1.bf16.msra.mxu0 0
        %1014 = vmatprep.subr.bf16.mxu0 0
        %1015 = vmatpush1.bf16.msra.mxu0 0
        %1016 = vmatprep.subr.bf16.mxu0 0
        %1017 = vmatpush1.bf16.msra.mxu0 0
        %1018 = vmatprep.subr.bf16.mxu0 0
        %1019 = vmatpush1.bf16.msra.mxu0 0
        %1020 = vmatprep.subr.bf16.mxu0 0
        %1021 = vmatpush1.bf16.msra.mxu0 0
        %1022 = vmatprep.subr.bf16.mxu0 0
        %1023 = vmatpush1.bf16.msra.mxu0 0
        %1024 = vmatprep.subr.bf16.mxu0 0
        %1025 = vmatpush1.bf16.msra.mxu0 0
        %1026 = vmatprep.subr.bf16.mxu0 0
        %1027 = vmatpush1.bf16.msra.mxu0 0
        %1028 = vmatprep.mubr.bf16.mxu0 0
        %1029 = vmatmul.mubr.bf16.gmra.mrb[0].mxu0 %v973
        %v1030 = vpop.f32.mrb[0].mxu0
        %v1031 = vadd.f32 0.0, %v1030
        %v1032 = vpop.f32.mrb[0].mxu0
        %v1033 = vpop.f32.mrb[0].mxu0
        %v1034 = vadd.f32 0.0, %v1033
        %v1035 = vpop.f32.mrb[0].mxu0
        %1036 = vmatprep.mubr.bf16.mxu0 0
        %1037 = vmatmul.mubr.bf16.gmra.mrb[0].mxu0 %v976
        %v1038 = vpop.f32.mrb[0].mxu0
        %v1039 = vadd.f32 0.0, %v1038
        %v1040 = vpop.f32.mrb[0].mxu0
        %v1041 = vpop.f32.mrb[0].mxu0
        %v1042 = vadd.f32 0.0, %v1041
        %v1043 = vpop.f32.mrb[0].mxu0
        %1044 = vmatprep.mubr.bf16.mxu0 0
        %1045 = vmatmul.mubr.bf16.gmra.mrb[0].mxu0 %v979
        %v1046 = vpop.f32.mrb[0].mxu0
        %v1047 = vadd.f32 0.0, %v1046
        %v1048 = vpop.f32.mrb[0].mxu0
        %v1049 = vpop.f32.mrb[0].mxu0
        %v1050 = vadd.f32 0.0, %v1049
        %v1051 = vpop.f32.mrb[0].mxu0
        %1052 = vmatprep.mubr.bf16.mxu0 0
        %1053 = vmatmul.mubr.bf16.gmra.mrb[0].mxu0 %v982
        %v1054 = vpop.f32.mrb[0].mxu0
        %v1055 = vadd.f32 0.0, %v1054
        %v1056 = vpop.f32.mrb[0].mxu0
        %v1057 = vpop.f32.mrb[0].mxu0
        %v1058 = vadd.f32 0.0, %v1057
        %v1059 = vpop.f32.mrb[0].mxu0
        %1060 = vmatprep.mubr.bf16.mxu0 0
        %1061 = vmatmul.mubr.bf16.gmra.mrb[0].mxu0 %v985
        %v1062 = vpop.f32.mrb[0].mxu0
        %v1063 = vadd.f32 0.0, %v1062
        %v1064 = vpop.f32.mrb[0].mxu0
        %v1065 = vpop.f32.mrb[0].mxu0
        %v1066 = vadd.f32 0.0, %v1065
        %v1067 = vpop.f32.mrb[0].mxu0
        %1068 = vmatprep.mubr.bf16.mxu0 0
        %1069 = vmatmul.mubr.bf16.gmra.mrb[0].mxu0 %v988
        %v1070 = vpop.f32.mrb[0].mxu0
        %v1071 = vadd.f32 0.0, %v1070
        %v1072 = vpop.f32.mrb[0].mxu0
        %v1073 = vpop.f32.mrb[0].mxu0
        %v1074 = vadd.f32 0.0, %v1073
        %v1075 = vpop.f32.mrb[0].mxu0
        %1076 = vmatprep.mubr.bf16.mxu0 0
        %1077 = vmatmul.mubr.bf16.gmra.mrb[0].mxu0 %v991
        %v1078 = vpop.f32.mrb[0].mxu0
        %v1079 = vadd.f32 0.0, %v1078
        %v1080 = vpop.f32.mrb[0].mxu0
        %v1081 = vpop.f32.mrb[0].mxu0
        %v1082 = vadd.f32 0.0, %v1081
        %v1083 = vpop.f32.mrb[0].mxu0
        %1084 = vmatprep.mubr.bf16.mxu0 0
        %1085 = vmatmul.mubr.bf16.gmra.mrb[0].mxu0 %v994
        %v1086 = vpop.f32.mrb[0].mxu0
        %v1087 = vadd.f32 0.0, %v1086
        %v1088 = vpop.f32.mrb[0].mxu0
        %v1089 = vpop.f32.mrb[0].mxu0
        %v1090 = vadd.f32 0.0, %v1089
        %v1091 = vpop.f32.mrb[0].mxu0
        %1092 = vdwg.mxu0
        %v1093 = vadd.f32 %v824, %v1031
        %v1094 = vadd.f32 %v825, %v1034
        %v1095 = vadd.f32 %v826, %v1039
        %v1096 = vadd.f32 %v827, %v1042
        %v1097 = vadd.f32 %v828, %v1047
        %v1098 = vadd.f32 %v829, %v1050
        %v1099 = vadd.f32 %v830, %v1055
        %v1100 = vadd.f32 %v831, %v1058
        %v1101 = vadd.f32 %v832, %v1063
        %v1102 = vadd.f32 %v833, %v1066
        %v1103 = vadd.f32 %v834, %v1071
        %v1104 = vadd.f32 %v835, %v1074
        %v1105 = vadd.f32 %v836, %v1079
        %v1106 = vadd.f32 %v837, %v1082
        %v1107 = vadd.f32 %v838, %v1087
        %v1108 = vadd.f32 %v839, %v1090
        %s1109 = scalar_lea.vmem %s224, 12
        %v1110 = vld [vmem:[%s1109] sm:$0xf]
        %v1111 = vld [vmem:[%s1109 + $0x4] sm:$0xf]
        %v1112 = vld [vmem:[%s1109 + $0xc] sm:$0xf]
        %v1113 = vld [vmem:[%s1109 + $0x10] sm:$0xf]
        %v1114 = vld [vmem:[%s1109 + $0x18] sm:$0xf]
        %v1115 = vld [vmem:[%s1109 + $0x1c] sm:$0xf]
        %v1116 = vld [vmem:[%s1109 + $0x24] sm:$0xf]
        %v1117 = vld [vmem:[%s1109 + $0x28] sm:$0xf]
        %v1118 = vld [vmem:[%s1109 + $0x30] sm:$0xf]
        %v1119 = vld [vmem:[%s1109 + $0x34] sm:$0xf]
        %v1120 = vld [vmem:[%s1109 + $0x3c] sm:$0xf]
        %v1121 = vld [vmem:[%s1109 + $0x40] sm:$0xf]
        %v1122 = vld [vmem:[%s1109 + $0x48] sm:$0xf]
        %v1123 = vld [vmem:[%s1109 + $0x4c] sm:$0xf]
        %v1124 = vld [vmem:[%s1109 + $0x54] sm:$0xf]
        %v1125 = vld [vmem:[%s1109 + $0x58] sm:$0xf]
        %s1126 = scalar_lea.vmem %s2, 48
        %v1127 = vld [vmem:[%s1126] sm:$0xf]
        %v1128 = vld [vmem:[%s1126 + $0x4] sm:$0xf]
        %v1129 = vld [vmem:[%s1126 + $0x8] sm:$0xf]
        %v1130 = vld [vmem:[%s1126 + $0xc] sm:$0xf]
        %v1147 = vunpack.c.l.b16 %v1110
        %v1148 = vunpack.c.l.b16 %v1111
        %v1149 = vunpack.c.l.b16 %v1112
        %v1150 = vunpack.c.l.b16 %v1113
        %v1151 = vunpack.c.l.b16 %v1114
        %v1152 = vunpack.c.l.b16 %v1115
        %v1153 = vunpack.c.l.b16 %v1116
        %v1154 = vunpack.c.l.b16 %v1117
        %v1155 = vunpack.c.l.b16 %v1118
        %v1156 = vunpack.c.l.b16 %v1119
        %v1157 = vunpack.c.l.b16 %v1120
        %v1158 = vunpack.c.l.b16 %v1121
        %v1159 = vunpack.c.l.b16 %v1122
        %v1160 = vunpack.c.l.b16 %v1123
        %v1161 = vunpack.c.l.b16 %v1124
        %v1162 = vunpack.c.l.b16 %v1125
        %v1163 = vpack.c.b16 %v1148, %v1147
        %v1164 = vpack.c.b16 %v1150, %v1149
        %v1165 = vpack.c.b16 %v1152, %v1151
        %v1166 = vpack.c.b16 %v1154, %v1153
        %v1167 = vpack.c.b16 %v1156, %v1155
        %v1168 = vpack.c.b16 %v1158, %v1157
        %v1169 = vpack.c.b16 %v1160, %v1159
        %v1170 = vpack.c.b16 %v1162, %v1161
        %v1175 = vunpack.c.l.b16 %v1127
        %v1176 = vunpack.c.l.b16 %v1128
        %v1177 = vunpack.c.l.b16 %v1129
        %v1178 = vunpack.c.l.b16 %v1130
        %v1179 = vpack.c.b16 %v1176, %v1175
        %v1180 = vpack.c.b16 %v1178, %v1177
        %v1184 = vsel %vm305, %v1163, 0
        %v1187 = vsel %vm305, %v1164, 0
        %v1190 = vsel %vm305, %v1165, 0
        %v1193 = vsel %vm305, %v1166, 0
        %v1196 = vsel %vm305, %v1167, 0
        %v1199 = vsel %vm305, %v1168, 0
        %v1202 = vsel %vm305, %v1169, 0
        %v1205 = vsel %vm305, %v1170, 0
        %1207 = vmatprep.subr.bf16.mxu0 0
        %1208 = vmatpush1.bf16.msra.mxu0 %v1179
        %1209 = vmatprep.subr.bf16.mxu0 0
        %1210 = vmatpush1.bf16.msra.mxu0 %v1180
        %1211 = vmatprep.subr.bf16.mxu0 0
        %1212 = vmatpush1.bf16.msra.mxu0 0
        %1213 = vmatprep.subr.bf16.mxu0 0
        %1214 = vmatpush1.bf16.msra.mxu0 0
        %1215 = vmatprep.subr.bf16.mxu0 0
        %1216 = vmatpush1.bf16.msra.mxu0 0
        %1217 = vmatprep.subr.bf16.mxu0 0
        %1218 = vmatpush1.bf16.msra.mxu0 0
        %1219 = vmatprep.subr.bf16.mxu0 0
        %1220 = vmatpush1.bf16.msra.mxu0 0
        %1221 = vmatprep.subr.bf16.mxu0 0
        %1222 = vmatpush1.bf16.msra.mxu0 0
        %1223 = vmatprep.subr.bf16.mxu0 0
        %1224 = vmatpush1.bf16.msra.mxu0 0
        %1225 = vmatprep.subr.bf16.mxu0 0
        %1226 = vmatpush1.bf16.msra.mxu0 0
        %1227 = vmatprep.subr.bf16.mxu0 0
        %1228 = vmatpush1.bf16.msra.mxu0 0
        %1229 = vmatprep.subr.bf16.mxu0 0
        %1230 = vmatpush1.bf16.msra.mxu0 0
        %1231 = vmatprep.subr.bf16.mxu0 0
        %1232 = vmatpush1.bf16.msra.mxu0 0
        %1233 = vmatprep.subr.bf16.mxu0 0
        %1234 = vmatpush1.bf16.msra.mxu0 0
        %1235 = vmatprep.subr.bf16.mxu0 0
        %1236 = vmatpush1.bf16.msra.mxu0 0
        %1237 = vmatprep.subr.bf16.mxu0 0
        %1238 = vmatpush1.bf16.msra.mxu0 0
        %1239 = vmatprep.mubr.bf16.mxu0 0
        %1240 = vmatmul.mubr.bf16.gmra.mrb[0].mxu0 %v1184
        %v1241 = vpop.f32.mrb[0].mxu0
        %v1242 = vadd.f32 0.0, %v1241
        %v1243 = vpop.f32.mrb[0].mxu0
        %v1244 = vpop.f32.mrb[0].mxu0
        %v1245 = vadd.f32 0.0, %v1244
        %v1246 = vpop.f32.mrb[0].mxu0
        %1247 = vmatprep.mubr.bf16.mxu0 0
        %1248 = vmatmul.mubr.bf16.gmra.mrb[0].mxu0 %v1187
        %v1249 = vpop.f32.mrb[0].mxu0
        %v1250 = vadd.f32 0.0, %v1249
        %v1251 = vpop.f32.mrb[0].mxu0
        %v1252 = vpop.f32.mrb[0].mxu0
        %v1253 = vadd.f32 0.0, %v1252
        %v1254 = vpop.f32.mrb[0].mxu0
        %1255 = vmatprep.mubr.bf16.mxu0 0
        %1256 = vmatmul.mubr.bf16.gmra.mrb[0].mxu0 %v1190
        %v1257 = vpop.f32.mrb[0].mxu0
        %v1258 = vadd.f32 0.0, %v1257
        %v1259 = vpop.f32.mrb[0].mxu0
        %v1260 = vpop.f32.mrb[0].mxu0
        %v1261 = vadd.f32 0.0, %v1260
        %v1262 = vpop.f32.mrb[0].mxu0
        %1263 = vmatprep.mubr.bf16.mxu0 0
        %1264 = vmatmul.mubr.bf16.gmra.mrb[0].mxu0 %v1193
        %v1265 = vpop.f32.mrb[0].mxu0
        %v1266 = vadd.f32 0.0, %v1265
        %v1267 = vpop.f32.mrb[0].mxu0
        %v1268 = vpop.f32.mrb[0].mxu0
        %v1269 = vadd.f32 0.0, %v1268
        %v1270 = vpop.f32.mrb[0].mxu0
        %1271 = vmatprep.mubr.bf16.mxu0 0
        %1272 = vmatmul.mubr.bf16.gmra.mrb[0].mxu0 %v1196
        %v1273 = vpop.f32.mrb[0].mxu0
        %v1274 = vadd.f32 0.0, %v1273
        %v1275 = vpop.f32.mrb[0].mxu0
        %v1276 = vpop.f32.mrb[0].mxu0
        %v1277 = vadd.f32 0.0, %v1276
        %v1278 = vpop.f32.mrb[0].mxu0
        %1279 = vmatprep.mubr.bf16.mxu0 0
        %1280 = vmatmul.mubr.bf16.gmra.mrb[0].mxu0 %v1199
        %v1281 = vpop.f32.mrb[0].mxu0
        %v1282 = vadd.f32 0.0, %v1281
        %v1283 = vpop.f32.mrb[0].mxu0
        %v1284 = vpop.f32.mrb[0].mxu0
        %v1285 = vadd.f32 0.0, %v1284
        %v1286 = vpop.f32.mrb[0].mxu0
        %1287 = vmatprep.mubr.bf16.mxu0 0
        %1288 = vmatmul.mubr.bf16.gmra.mrb[0].mxu0 %v1202
        %v1289 = vpop.f32.mrb[0].mxu0
        %v1290 = vadd.f32 0.0, %v1289
        %v1291 = vpop.f32.mrb[0].mxu0
        %v1292 = vpop.f32.mrb[0].mxu0
        %v1293 = vadd.f32 0.0, %v1292
        %v1294 = vpop.f32.mrb[0].mxu0
        %1295 = vmatprep.mubr.bf16.mxu0 0
        %1296 = vmatmul.mubr.bf16.gmra.mrb[0].mxu0 %v1205
        %v1297 = vpop.f32.mrb[0].mxu0
        %v1298 = vadd.f32 0.0, %v1297
        %v1299 = vpop.f32.mrb[0].mxu0
        %v1300 = vpop.f32.mrb[0].mxu0
        %v1301 = vadd.f32 0.0, %v1300
        %v1302 = vpop.f32.mrb[0].mxu0
        %1303 = vdwg.mxu0
        %v1304 = vadd.f32 %v1093, %v1242
        %v1305 = vadd.f32 %v1094, %v1245
        %v1306 = vadd.f32 %v1095, %v1250
        %v1307 = vadd.f32 %v1096, %v1253
        %v1308 = vadd.f32 %v1097, %v1258
        %v1309 = vadd.f32 %v1098, %v1261
        %v1310 = vadd.f32 %v1099, %v1266
        %v1311 = vadd.f32 %v1100, %v1269
        %v1312 = vadd.f32 %v1101, %v1274
        %v1313 = vadd.f32 %v1102, %v1277
        %v1314 = vadd.f32 %v1103, %v1282
        %v1315 = vadd.f32 %v1104, %v1285
        %v1316 = vadd.f32 %v1105, %v1290
        %v1317 = vadd.f32 %v1106, %v1293
        %v1318 = vadd.f32 %v1107, %v1298
        %v1319 = vadd.f32 %v1108, %v1301
        %v1320 = vld [vmem:[%s1109] sm:$0xf]
        %v1321 = vld [vmem:[%s1109 + $0x4] sm:$0xf]
        %v1322 = vld [vmem:[%s1109 + $0x8] sm:$0x1]
        %v1323 = vld [vmem:[%s1109 + $0xc] sm:$0xf]
        %v1324 = vld [vmem:[%s1109 + $0x10] sm:$0xf]
        %v1325 = vld [vmem:[%s1109 + $0x14] sm:$0x1]
        %v1326 = vld [vmem:[%s1109 + $0x18] sm:$0xf]
        %v1327 = vld [vmem:[%s1109 + $0x1c] sm:$0xf]
        %v1328 = vld [vmem:[%s1109 + $0x20] sm:$0x1]
        %v1329 = vld [vmem:[%s1109 + $0x24] sm:$0xf]
        %v1330 = vld [vmem:[%s1109 + $0x28] sm:$0xf]
        %v1331 = vld [vmem:[%s1109 + $0x2c] sm:$0x1]
        %v1332 = vld [vmem:[%s1109 + $0x30] sm:$0xf]
        %v1333 = vld [vmem:[%s1109 + $0x34] sm:$0xf]
        %v1334 = vld [vmem:[%s1109 + $0x38] sm:$0x1]
        %v1335 = vld [vmem:[%s1109 + $0x3c] sm:$0xf]
        %v1336 = vld [vmem:[%s1109 + $0x40] sm:$0xf]
        %v1337 = vld [vmem:[%s1109 + $0x44] sm:$0x1]
        %v1338 = vld [vmem:[%s1109 + $0x48] sm:$0xf]
        %v1339 = vld [vmem:[%s1109 + $0x4c] sm:$0xf]
        %v1340 = vld [vmem:[%s1109 + $0x50] sm:$0x1]
        %v1341 = vld [vmem:[%s1109 + $0x54] sm:$0xf]
        %v1342 = vld [vmem:[%s1109 + $0x58] sm:$0xf]
        %v1343 = vld [vmem:[%s1109 + $0x5c] sm:$0x1]
        %v1345 = vshrl.u32 %v1320, 16
        %v1347 = vrot.slane %v1345, 4
        %v1348 = vshll.u32 %v1320, 16
        %v1350 = vrot.slane %v1348, 5
        %v1351 = vor.u32 %v1347, %v1350
        %v1352 = vrot.slane %v1351, 4
        %v1354 = vshll.u32 %v1321, 16
        %v1356 = vrot.slane %v1354, 5
        %v1357 = vsel %vm469, %v1352, %v1356
        %v1358 = vshrl.u32 %v1321, 16
        %v1360 = vrot.slane %v1358, 4
        %v1361 = vor.u32 %v1360, %v1356
        %v1362 = vrot.slane %v1361, 4
        %v1364 = vshll.u32 %v1322, 16
        %v1366 = vrot.slane %v1364, 5
        %v1367 = vsel %vm469, %v1362, %v1366
        %v1369 = vshrl.u32 %v1323, 16
        %v1371 = vrot.slane %v1369, 4
        %v1372 = vshll.u32 %v1323, 16
        %v1374 = vrot.slane %v1372, 5
        %v1375 = vor.u32 %v1371, %v1374
        %v1376 = vrot.slane %v1375, 4
        %v1378 = vshll.u32 %v1324, 16
        %v1380 = vrot.slane %v1378, 5
        %v1381 = vsel %vm469, %v1376, %v1380
        %v1382 = vshrl.u32 %v1324, 16
        %v1384 = vrot.slane %v1382, 4
        %v1385 = vor.u32 %v1384, %v1380
        %v1386 = vrot.slane %v1385, 4
        %v1388 = vshll.u32 %v1325, 16
        %v1390 = vrot.slane %v1388, 5
        %v1391 = vsel %vm469, %v1386, %v1390
        %v1393 = vshrl.u32 %v1326, 16
        %v1395 = vrot.slane %v1393, 4
        %v1396 = vshll.u32 %v1326, 16
        %v1398 = vrot.slane %v1396, 5
        %v1399 = vor.u32 %v1395, %v1398
        %v1400 = vrot.slane %v1399, 4
        %v1402 = vshll.u32 %v1327, 16
        %v1404 = vrot.slane %v1402, 5
        %v1405 = vsel %vm469, %v1400, %v1404
        %v1406 = vshrl.u32 %v1327, 16
        %v1408 = vrot.slane %v1406, 4
        %v1409 = vor.u32 %v1408, %v1404
        %v1410 = vrot.slane %v1409, 4
        %v1412 = vshll.u32 %v1328, 16
        %v1414 = vrot.slane %v1412, 5
        %v1415 = vsel %vm469, %v1410, %v1414
        %v1417 = vshrl.u32 %v1329, 16
        %v1419 = vrot.slane %v1417, 4
        %v1420 = vshll.u32 %v1329, 16
        %v1422 = vrot.slane %v1420, 5
        %v1423 = vor.u32 %v1419, %v1422
        %v1424 = vrot.slane %v1423, 4
        %v1426 = vshll.u32 %v1330, 16
        %v1428 = vrot.slane %v1426, 5
        %v1429 = vsel %vm469, %v1424, %v1428
        %v1430 = vshrl.u32 %v1330, 16
        %v1432 = vrot.slane %v1430, 4
        %v1433 = vor.u32 %v1432, %v1428
        %v1434 = vrot.slane %v1433, 4
        %v1436 = vshll.u32 %v1331, 16
        %v1438 = vrot.slane %v1436, 5
        %v1439 = vsel %vm469, %v1434, %v1438
        %v1441 = vshrl.u32 %v1332, 16
        %v1443 = vrot.slane %v1441, 4
        %v1444 = vshll.u32 %v1332, 16
        %v1446 = vrot.slane %v1444, 5
        %v1447 = vor.u32 %v1443, %v1446
        %v1448 = vrot.slane %v1447, 4
        %v1450 = vshll.u32 %v1333, 16
        %v1452 = vrot.slane %v1450, 5
        %v1453 = vsel %vm469, %v1448, %v1452
        %v1454 = vshrl.u32 %v1333, 16
        %v1456 = vrot.slane %v1454, 4
        %v1457 = vor.u32 %v1456, %v1452
        %v1458 = vrot.slane %v1457, 4
        %v1460 = vshll.u32 %v1334, 16
        %v1462 = vrot.slane %v1460, 5
        %v1463 = vsel %vm469, %v1458, %v1462
        %v1465 = vshrl.u32 %v1335, 16
        %v1467 = vrot.slane %v1465, 4
        %v1468 = vshll.u32 %v1335, 16
        %v1470 = vrot.slane %v1468, 5
        %v1471 = vor.u32 %v1467, %v1470
        %v1472 = vrot.slane %v1471, 4
        %v1474 = vshll.u32 %v1336, 16
        %v1476 = vrot.slane %v1474, 5
        %v1477 = vsel %vm469, %v1472, %v1476
        %v1478 = vshrl.u32 %v1336, 16
        %v1480 = vrot.slane %v1478, 4
        %v1481 = vor.u32 %v1480, %v1476
        %v1482 = vrot.slane %v1481, 4
        %v1484 = vshll.u32 %v1337, 16
        %v1486 = vrot.slane %v1484, 5
        %v1487 = vsel %vm469, %v1482, %v1486
        %v1489 = vshrl.u32 %v1338, 16
        %v1491 = vrot.slane %v1489, 4
        %v1492 = vshll.u32 %v1338, 16
        %v1494 = vrot.slane %v1492, 5
        %v1495 = vor.u32 %v1491, %v1494
        %v1496 = vrot.slane %v1495, 4
        %v1498 = vshll.u32 %v1339, 16
        %v1500 = vrot.slane %v1498, 5
        %v1501 = vsel %vm469, %v1496, %v1500
        %v1502 = vshrl.u32 %v1339, 16
        %v1504 = vrot.slane %v1502, 4
        %v1505 = vor.u32 %v1504, %v1500
        %v1506 = vrot.slane %v1505, 4
        %v1508 = vshll.u32 %v1340, 16
        %v1510 = vrot.slane %v1508, 5
        %v1511 = vsel %vm469, %v1506, %v1510
        %v1513 = vshrl.u32 %v1341, 16
        %v1515 = vrot.slane %v1513, 4
        %v1516 = vshll.u32 %v1341, 16
        %v1518 = vrot.slane %v1516, 5
        %v1519 = vor.u32 %v1515, %v1518
        %v1520 = vrot.slane %v1519, 4
        %v1522 = vshll.u32 %v1342, 16
        %v1524 = vrot.slane %v1522, 5
        %v1525 = vsel %vm469, %v1520, %v1524
        %v1526 = vshrl.u32 %v1342, 16
        %v1528 = vrot.slane %v1526, 4
        %v1529 = vor.u32 %v1528, %v1524
        %v1530 = vrot.slane %v1529, 4
        %v1532 = vshll.u32 %v1343, 16
        %v1534 = vrot.slane %v1532, 5
        %v1535 = vsel %vm469, %v1530, %v1534
        %s1536 = scalar_lea.vmem %s2, 64
        %v1537 = vld [vmem:[%s1536] sm:$0xf]
        %v1538 = vld [vmem:[%s1536 + $0x4] sm:$0xf]
        %v1539 = vld [vmem:[%s1536 + $0x8] sm:$0xf]
        %v1540 = vld [vmem:[%s1536 + $0xc] sm:$0xf]
        %v1541 = vunpack.c.l.b16 %v1357
        %v1542 = vunpack.c.l.b16 %v1367
        %v1543 = vunpack.c.l.b16 %v1381
        %v1544 = vunpack.c.l.b16 %v1391
        %v1545 = vunpack.c.l.b16 %v1405
        %v1546 = vunpack.c.l.b16 %v1415
        %v1547 = vunpack.c.l.b16 %v1429
        %v1548 = vunpack.c.l.b16 %v1439
        %v1549 = vunpack.c.l.b16 %v1453
        %v1550 = vunpack.c.l.b16 %v1463
        %v1551 = vunpack.c.l.b16 %v1477
        %v1552 = vunpack.c.l.b16 %v1487
        %v1553 = vunpack.c.l.b16 %v1501
        %v1554 = vunpack.c.l.b16 %v1511
        %v1555 = vunpack.c.l.b16 %v1525
        %v1556 = vunpack.c.l.b16 %v1535
        %v1557 = vpack.c.b16 %v1542, %v1541
        %v1558 = vpack.c.b16 %v1544, %v1543
        %v1559 = vpack.c.b16 %v1546, %v1545
        %v1560 = vpack.c.b16 %v1548, %v1547
        %v1561 = vpack.c.b16 %v1550, %v1549
        %v1562 = vpack.c.b16 %v1552, %v1551
        %v1563 = vpack.c.b16 %v1554, %v1553
        %v1564 = vpack.c.b16 %v1556, %v1555
        %v1569 = vunpack.c.l.b16 %v1537
        %v1570 = vunpack.c.l.b16 %v1538
        %v1571 = vunpack.c.l.b16 %v1539
        %v1572 = vunpack.c.l.b16 %v1540
        %v1573 = vpack.c.b16 %v1570, %v1569
        %v1574 = vpack.c.b16 %v1572, %v1571
        %v1578 = vsel %vm305, %v1557, 0
        %v1581 = vsel %vm305, %v1558, 0
        %v1584 = vsel %vm305, %v1559, 0
        %v1587 = vsel %vm305, %v1560, 0
        %v1590 = vsel %vm305, %v1561, 0
        %v1593 = vsel %vm305, %v1562, 0
        %v1596 = vsel %vm305, %v1563, 0
        %v1599 = vsel %vm305, %v1564, 0
        %1601 = vmatprep.subr.bf16.mxu0 0
        %1602 = vmatpush1.bf16.msra.mxu0 %v1573
        %1603 = vmatprep.subr.bf16.mxu0 0
        %1604 = vmatpush1.bf16.msra.mxu0 %v1574
        %1605 = vmatprep.subr.bf16.mxu0 0
        %1606 = vmatpush1.bf16.msra.mxu0 0
        %1607 = vmatprep.subr.bf16.mxu0 0
        %1608 = vmatpush1.bf16.msra.mxu0 0
        %1609 = vmatprep.subr.bf16.mxu0 0
        %1610 = vmatpush1.bf16.msra.mxu0 0
        %1611 = vmatprep.subr.bf16.mxu0 0
        %1612 = vmatpush1.bf16.msra.mxu0 0
        %1613 = vmatprep.subr.bf16.mxu0 0
        %1614 = vmatpush1.bf16.msra.mxu0 0
        %1615 = vmatprep.subr.bf16.mxu0 0
        %1616 = vmatpush1.bf16.msra.mxu0 0
        %1617 = vmatprep.subr.bf16.mxu0 0
        %1618 = vmatpush1.bf16.msra.mxu0 0
        %1619 = vmatprep.subr.bf16.mxu0 0
        %1620 = vmatpush1.bf16.msra.mxu0 0
        %1621 = vmatprep.subr.bf16.mxu0 0
        %1622 = vmatpush1.bf16.msra.mxu0 0
        %1623 = vmatprep.subr.bf16.mxu0 0
        %1624 = vmatpush1.bf16.msra.mxu0 0
        %1625 = vmatprep.subr.bf16.mxu0 0
        %1626 = vmatpush1.bf16.msra.mxu0 0
        %1627 = vmatprep.subr.bf16.mxu0 0
        %1628 = vmatpush1.bf16.msra.mxu0 0
        %1629 = vmatprep.subr.bf16.mxu0 0
        %1630 = vmatpush1.bf16.msra.mxu0 0
        %1631 = vmatprep.subr.bf16.mxu0 0
        %1632 = vmatpush1.bf16.msra.mxu0 0
        %1633 = vmatprep.mubr.bf16.mxu0 0
        %1634 = vmatmul.mubr.bf16.gmra.mrb[0].mxu0 %v1578
        %v1635 = vpop.f32.mrb[0].mxu0
        %v1636 = vadd.f32 0.0, %v1635
        %v1637 = vpop.f32.mrb[0].mxu0
        %v1638 = vpop.f32.mrb[0].mxu0
        %v1639 = vadd.f32 0.0, %v1638
        %v1640 = vpop.f32.mrb[0].mxu0
        %1641 = vmatprep.mubr.bf16.mxu0 0
        %1642 = vmatmul.mubr.bf16.gmra.mrb[0].mxu0 %v1581
        %v1643 = vpop.f32.mrb[0].mxu0
        %v1644 = vadd.f32 0.0, %v1643
        %v1645 = vpop.f32.mrb[0].mxu0
        %v1646 = vpop.f32.mrb[0].mxu0
        %v1647 = vadd.f32 0.0, %v1646
        %v1648 = vpop.f32.mrb[0].mxu0
        %1649 = vmatprep.mubr.bf16.mxu0 0
        %1650 = vmatmul.mubr.bf16.gmra.mrb[0].mxu0 %v1584
        %v1651 = vpop.f32.mrb[0].mxu0
        %v1652 = vadd.f32 0.0, %v1651
        %v1653 = vpop.f32.mrb[0].mxu0
        %v1654 = vpop.f32.mrb[0].mxu0
        %v1655 = vadd.f32 0.0, %v1654
        %v1656 = vpop.f32.mrb[0].mxu0
        %1657 = vmatprep.mubr.bf16.mxu0 0
        %1658 = vmatmul.mubr.bf16.gmra.mrb[0].mxu0 %v1587
        %v1659 = vpop.f32.mrb[0].mxu0
        %v1660 = vadd.f32 0.0, %v1659
        %v1661 = vpop.f32.mrb[0].mxu0
        %v1662 = vpop.f32.mrb[0].mxu0
        %v1663 = vadd.f32 0.0, %v1662
        %v1664 = vpop.f32.mrb[0].mxu0
        %1665 = vmatprep.mubr.bf16.mxu0 0
        %1666 = vmatmul.mubr.bf16.gmra.mrb[0].mxu0 %v1590
        %v1667 = vpop.f32.mrb[0].mxu0
        %v1668 = vadd.f32 0.0, %v1667
        %v1669 = vpop.f32.mrb[0].mxu0
        %v1670 = vpop.f32.mrb[0].mxu0
        %v1671 = vadd.f32 0.0, %v1670
        %v1672 = vpop.f32.mrb[0].mxu0
        %1673 = vmatprep.mubr.bf16.mxu0 0
        %1674 = vmatmul.mubr.bf16.gmra.mrb[0].mxu0 %v1593
        %v1675 = vpop.f32.mrb[0].mxu0
        %v1676 = vadd.f32 0.0, %v1675
        %v1677 = vpop.f32.mrb[0].mxu0
        %v1678 = vpop.f32.mrb[0].mxu0
        %v1679 = vadd.f32 0.0, %v1678
        %v1680 = vpop.f32.mrb[0].mxu0
        %1681 = vmatprep.mubr.bf16.mxu0 0
        %1682 = vmatmul.mubr.bf16.gmra.mrb[0].mxu0 %v1596
        %v1683 = vpop.f32.mrb[0].mxu0
        %v1684 = vadd.f32 0.0, %v1683
        %v1685 = vpop.f32.mrb[0].mxu0
        %v1686 = vpop.f32.mrb[0].mxu0
        %v1687 = vadd.f32 0.0, %v1686
        %v1688 = vpop.f32.mrb[0].mxu0
        %1689 = vmatprep.mubr.bf16.mxu0 0
        %1690 = vmatmul.mubr.bf16.gmra.mrb[0].mxu0 %v1599
        %v1691 = vpop.f32.mrb[0].mxu0
        %v1692 = vadd.f32 0.0, %v1691
        %v1693 = vpop.f32.mrb[0].mxu0
        %v1694 = vpop.f32.mrb[0].mxu0
        %v1695 = vadd.f32 0.0, %v1694
        %v1696 = vpop.f32.mrb[0].mxu0
        %1697 = vdwg.mxu0
        %v1698 = vadd.f32 %v1304, %v1636
        %v1699 = vadd.f32 %v1305, %v1639
        %v1700 = vadd.f32 %v1306, %v1644
        %v1701 = vadd.f32 %v1307, %v1647
        %v1702 = vadd.f32 %v1308, %v1652
        %v1703 = vadd.f32 %v1309, %v1655
        %v1704 = vadd.f32 %v1310, %v1660
        %v1705 = vadd.f32 %v1311, %v1663
        %v1706 = vadd.f32 %v1312, %v1668
        %v1707 = vadd.f32 %v1313, %v1671
        %v1708 = vadd.f32 %v1314, %v1676
        %v1709 = vadd.f32 %v1315, %v1679
        %v1710 = vadd.f32 %v1316, %v1684
        %v1711 = vadd.f32 %v1317, %v1687
        %v1712 = vadd.f32 %v1318, %v1692
        %v1713 = vadd.f32 %v1319, %v1695
        %v1714 = vld [vmem:[%s1109] sm:$0xe]
        %v1715 = vld [vmem:[%s1109 + $0xc] sm:$0xe]
        %v1716 = vld [vmem:[%s1109 + $0x18] sm:$0xe]
        %v1717 = vld [vmem:[%s1109 + $0x24] sm:$0xe]
        %v1718 = vld [vmem:[%s1109 + $0x30] sm:$0xe]
        %v1719 = vld [vmem:[%s1109 + $0x3c] sm:$0xe]
        %v1720 = vld [vmem:[%s1109 + $0x48] sm:$0xe]
        %v1721 = vld [vmem:[%s1109 + $0x54] sm:$0xe]
        %v1746 = vrot.slane %v1714, 5
        %v1747 = vrot.slane %v1746, 4
        %v1748 = vrot.slane %v1321, 5
        %v1749 = vsel %vm874, %v1747, %v1748
        %v1750 = vrot.slane %v1748, 4
        %v1751 = vrot.slane %v1322, 5
        %v1752 = vsel %vm874, %v1750, %v1751
        %v1753 = vrot.slane %v1715, 5
        %v1754 = vrot.slane %v1753, 4
        %v1755 = vrot.slane %v1324, 5
        %v1756 = vsel %vm874, %v1754, %v1755
        %v1757 = vrot.slane %v1755, 4
        %v1758 = vrot.slane %v1325, 5
        %v1759 = vsel %vm874, %v1757, %v1758
        %v1760 = vrot.slane %v1716, 5
        %v1761 = vrot.slane %v1760, 4
        %v1762 = vrot.slane %v1327, 5
        %v1763 = vsel %vm874, %v1761, %v1762
        %v1764 = vrot.slane %v1762, 4
        %v1765 = vrot.slane %v1328, 5
        %v1766 = vsel %vm874, %v1764, %v1765
        %v1767 = vrot.slane %v1717, 5
        %v1768 = vrot.slane %v1767, 4
        %v1769 = vrot.slane %v1330, 5
        %v1770 = vsel %vm874, %v1768, %v1769
        %v1771 = vrot.slane %v1769, 4
        %v1772 = vrot.slane %v1331, 5
        %v1773 = vsel %vm874, %v1771, %v1772
        %v1774 = vrot.slane %v1718, 5
        %v1775 = vrot.slane %v1774, 4
        %v1776 = vrot.slane %v1333, 5
        %v1777 = vsel %vm874, %v1775, %v1776
        %v1778 = vrot.slane %v1776, 4
        %v1779 = vrot.slane %v1334, 5
        %v1780 = vsel %vm874, %v1778, %v1779
        %v1781 = vrot.slane %v1719, 5
        %v1782 = vrot.slane %v1781, 4
        %v1783 = vrot.slane %v1336, 5
        %v1784 = vsel %vm874, %v1782, %v1783
        %v1785 = vrot.slane %v1783, 4
        %v1786 = vrot.slane %v1337, 5
        %v1787 = vsel %vm874, %v1785, %v1786
        %v1788 = vrot.slane %v1720, 5
        %v1789 = vrot.slane %v1788, 4
        %v1790 = vrot.slane %v1339, 5
        %v1791 = vsel %vm874, %v1789, %v1790
        %v1792 = vrot.slane %v1790, 4
        %v1793 = vrot.slane %v1340, 5
        %v1794 = vsel %vm874, %v1792, %v1793
        %v1795 = vrot.slane %v1721, 5
        %v1796 = vrot.slane %v1795, 4
        %v1797 = vrot.slane %v1342, 5
        %v1798 = vsel %vm874, %v1796, %v1797
        %v1799 = vrot.slane %v1797, 4
        %v1800 = vrot.slane %v1343, 5
        %v1801 = vsel %vm874, %v1799, %v1800
        %s1802 = scalar_lea.vmem %s2, 80
        %v1803 = vld [vmem:[%s1802] sm:$0xf]
        %v1804 = vld [vmem:[%s1802 + $0x4] sm:$0xf]
        %v1805 = vld [vmem:[%s1802 + $0x8] sm:$0xf]
        %v1806 = vld [vmem:[%s1802 + $0xc] sm:$0xf]
        %v1807 = vunpack.c.l.b16 %v1749
        %v1808 = vunpack.c.l.b16 %v1752
        %v1809 = vunpack.c.l.b16 %v1756
        %v1810 = vunpack.c.l.b16 %v1759
        %v1811 = vunpack.c.l.b16 %v1763
        %v1812 = vunpack.c.l.b16 %v1766
        %v1813 = vunpack.c.l.b16 %v1770
        %v1814 = vunpack.c.l.b16 %v1773
        %v1815 = vunpack.c.l.b16 %v1777
        %v1816 = vunpack.c.l.b16 %v1780
        %v1817 = vunpack.c.l.b16 %v1784
        %v1818 = vunpack.c.l.b16 %v1787
        %v1819 = vunpack.c.l.b16 %v1791
        %v1820 = vunpack.c.l.b16 %v1794
        %v1821 = vunpack.c.l.b16 %v1798
        %v1822 = vunpack.c.l.b16 %v1801
        %v1823 = vpack.c.b16 %v1808, %v1807
        %v1824 = vpack.c.b16 %v1810, %v1809
        %v1825 = vpack.c.b16 %v1812, %v1811
        %v1826 = vpack.c.b16 %v1814, %v1813
        %v1827 = vpack.c.b16 %v1816, %v1815
        %v1828 = vpack.c.b16 %v1818, %v1817
        %v1829 = vpack.c.b16 %v1820, %v1819
        %v1830 = vpack.c.b16 %v1822, %v1821
        %v1835 = vunpack.c.l.b16 %v1803
        %v1836 = vunpack.c.l.b16 %v1804
        %v1837 = vunpack.c.l.b16 %v1805
        %v1838 = vunpack.c.l.b16 %v1806
        %v1839 = vpack.c.b16 %v1836, %v1835
        %v1840 = vpack.c.b16 %v1838, %v1837
        %v1844 = vsel %vm305, %v1823, 0
        %v1847 = vsel %vm305, %v1824, 0
        %v1850 = vsel %vm305, %v1825, 0
        %v1853 = vsel %vm305, %v1826, 0
        %v1856 = vsel %vm305, %v1827, 0
        %v1859 = vsel %vm305, %v1828, 0
        %v1862 = vsel %vm305, %v1829, 0
        %v1865 = vsel %vm305, %v1830, 0
        %1867 = vmatprep.subr.bf16.mxu0 0
        %1868 = vmatpush1.bf16.msra.mxu0 %v1839
        %1869 = vmatprep.subr.bf16.mxu0 0
        %1870 = vmatpush1.bf16.msra.mxu0 %v1840
        %1871 = vmatprep.subr.bf16.mxu0 0
        %1872 = vmatpush1.bf16.msra.mxu0 0
        %1873 = vmatprep.subr.bf16.mxu0 0
        %1874 = vmatpush1.bf16.msra.mxu0 0
        %1875 = vmatprep.subr.bf16.mxu0 0
        %1876 = vmatpush1.bf16.msra.mxu0 0
        %1877 = vmatprep.subr.bf16.mxu0 0
        %1878 = vmatpush1.bf16.msra.mxu0 0
        %1879 = vmatprep.subr.bf16.mxu0 0
        %1880 = vmatpush1.bf16.msra.mxu0 0
        %1881 = vmatprep.subr.bf16.mxu0 0
        %1882 = vmatpush1.bf16.msra.mxu0 0
        %1883 = vmatprep.subr.bf16.mxu0 0
        %1884 = vmatpush1.bf16.msra.mxu0 0
        %1885 = vmatprep.subr.bf16.mxu0 0
        %1886 = vmatpush1.bf16.msra.mxu0 0
        %1887 = vmatprep.subr.bf16.mxu0 0
        %1888 = vmatpush1.bf16.msra.mxu0 0
        %1889 = vmatprep.subr.bf16.mxu0 0
        %1890 = vmatpush1.bf16.msra.mxu0 0
        %1891 = vmatprep.subr.bf16.mxu0 0
        %1892 = vmatpush1.bf16.msra.mxu0 0
        %1893 = vmatprep.subr.bf16.mxu0 0
        %1894 = vmatpush1.bf16.msra.mxu0 0
        %1895 = vmatprep.subr.bf16.mxu0 0
        %1896 = vmatpush1.bf16.msra.mxu0 0
        %1897 = vmatprep.subr.bf16.mxu0 0
        %1898 = vmatpush1.bf16.msra.mxu0 0
        %1899 = vmatprep.mubr.bf16.mxu0 0
        %1900 = vmatmul.mubr.bf16.gmra.mrb[0].mxu0 %v1844
        %v1901 = vpop.f32.mrb[0].mxu0
        %v1902 = vadd.f32 0.0, %v1901
        %v1903 = vpop.f32.mrb[0].mxu0
        %v1904 = vpop.f32.mrb[0].mxu0
        %v1905 = vadd.f32 0.0, %v1904
        %v1906 = vpop.f32.mrb[0].mxu0
        %1907 = vmatprep.mubr.bf16.mxu0 0
        %1908 = vmatmul.mubr.bf16.gmra.mrb[0].mxu0 %v1847
        %v1909 = vpop.f32.mrb[0].mxu0
        %v1910 = vadd.f32 0.0, %v1909
        %v1911 = vpop.f32.mrb[0].mxu0
        %v1912 = vpop.f32.mrb[0].mxu0
        %v1913 = vadd.f32 0.0, %v1912
        %v1914 = vpop.f32.mrb[0].mxu0
        %1915 = vmatprep.mubr.bf16.mxu0 0
        %1916 = vmatmul.mubr.bf16.gmra.mrb[0].mxu0 %v1850
        %v1917 = vpop.f32.mrb[0].mxu0
        %v1918 = vadd.f32 0.0, %v1917
        %v1919 = vpop.f32.mrb[0].mxu0
        %v1920 = vpop.f32.mrb[0].mxu0
        %v1921 = vadd.f32 0.0, %v1920
        %v1922 = vpop.f32.mrb[0].mxu0
        %1923 = vmatprep.mubr.bf16.mxu0 0
        %1924 = vmatmul.mubr.bf16.gmra.mrb[0].mxu0 %v1853
        %v1925 = vpop.f32.mrb[0].mxu0
        %v1926 = vadd.f32 0.0, %v1925
        %v1927 = vpop.f32.mrb[0].mxu0
        %v1928 = vpop.f32.mrb[0].mxu0
        %v1929 = vadd.f32 0.0, %v1928
        %v1930 = vpop.f32.mrb[0].mxu0
        %1931 = vmatprep.mubr.bf16.mxu0 0
        %1932 = vmatmul.mubr.bf16.gmra.mrb[0].mxu0 %v1856
        %v1933 = vpop.f32.mrb[0].mxu0
        %v1934 = vadd.f32 0.0, %v1933
        %v1935 = vpop.f32.mrb[0].mxu0
        %v1936 = vpop.f32.mrb[0].mxu0
        %v1937 = vadd.f32 0.0, %v1936
        %v1938 = vpop.f32.mrb[0].mxu0
        %1939 = vmatprep.mubr.bf16.mxu0 0
        %1940 = vmatmul.mubr.bf16.gmra.mrb[0].mxu0 %v1859
        %v1941 = vpop.f32.mrb[0].mxu0
        %v1942 = vadd.f32 0.0, %v1941
        %v1943 = vpop.f32.mrb[0].mxu0
        %v1944 = vpop.f32.mrb[0].mxu0
        %v1945 = vadd.f32 0.0, %v1944
        %v1946 = vpop.f32.mrb[0].mxu0
        %1947 = vmatprep.mubr.bf16.mxu0 0
        %1948 = vmatmul.mubr.bf16.gmra.mrb[0].mxu0 %v1862
        %v1949 = vpop.f32.mrb[0].mxu0
        %v1950 = vadd.f32 0.0, %v1949
        %v1951 = vpop.f32.mrb[0].mxu0
        %v1952 = vpop.f32.mrb[0].mxu0
        %v1953 = vadd.f32 0.0, %v1952
        %v1954 = vpop.f32.mrb[0].mxu0
        %1955 = vmatprep.mubr.bf16.mxu0 0
        %1956 = vmatmul.mubr.bf16.gmra.mrb[0].mxu0 %v1865
        %v1957 = vpop.f32.mrb[0].mxu0
        %v1958 = vadd.f32 0.0, %v1957
        %v1959 = vpop.f32.mrb[0].mxu0
        %v1960 = vpop.f32.mrb[0].mxu0
        %v1961 = vadd.f32 0.0, %v1960
        %v1962 = vpop.f32.mrb[0].mxu0
        %1963 = vdwg.mxu0
        %v1964 = vadd.f32 %v1698, %v1902
        %v1965 = vadd.f32 %v1699, %v1905
        %v1966 = vadd.f32 %v1700, %v1910
        %v1967 = vadd.f32 %v1701, %v1913
        %v1968 = vadd.f32 %v1702, %v1918
        %v1969 = vadd.f32 %v1703, %v1921
        %v1970 = vadd.f32 %v1704, %v1926
        %v1971 = vadd.f32 %v1705, %v1929
        %v1972 = vadd.f32 %v1706, %v1934
        %v1973 = vadd.f32 %v1707, %v1937
        %v1974 = vadd.f32 %v1708, %v1942
        %v1975 = vadd.f32 %v1709, %v1945
        %v1976 = vadd.f32 %v1710, %v1950
        %v1977 = vadd.f32 %v1711, %v1953
        %v1978 = vadd.f32 %v1712, %v1958
        %v1979 = vadd.f32 %v1713, %v1961
        %s1980 = scalar_lea.vmem %s224, 24
        %v1981 = vld [vmem:[%s1980] sm:$0xf]
        %v1982 = vld [vmem:[%s1980 + $0x4] sm:$0xf]
        %v1983 = vld [vmem:[%s1980 + $0xc] sm:$0xf]
        %v1984 = vld [vmem:[%s1980 + $0x10] sm:$0xf]
        %v1985 = vld [vmem:[%s1980 + $0x18] sm:$0xf]
        %v1986 = vld [vmem:[%s1980 + $0x1c] sm:$0xf]
        %v1987 = vld [vmem:[%s1980 + $0x24] sm:$0xf]
        %v1988 = vld [vmem:[%s1980 + $0x28] sm:$0xf]
        %v1989 = vld [vmem:[%s1980 + $0x30] sm:$0xf]
        %v1990 = vld [vmem:[%s1980 + $0x34] sm:$0xf]
        %v1991 = vld [vmem:[%s1980 + $0x3c] sm:$0xf]
        %v1992 = vld [vmem:[%s1980 + $0x40] sm:$0xf]
        %v1993 = vld [vmem:[%s1980 + $0x48] sm:$0xf]
        %v1994 = vld [vmem:[%s1980 + $0x4c] sm:$0xf]
        %v1995 = vld [vmem:[%s1980 + $0x54] sm:$0xf]
        %v1996 = vld [vmem:[%s1980 + $0x58] sm:$0xf]
        %s1997 = scalar_lea.vmem %s2, 96
        %v1998 = vld [vmem:[%s1997] sm:$0xf]
        %v1999 = vld [vmem:[%s1997 + $0x4] sm:$0xf]
        %v2000 = vld [vmem:[%s1997 + $0x8] sm:$0xf]
        %v2001 = vld [vmem:[%s1997 + $0xc] sm:$0xf]
        %v2018 = vunpack.c.l.b16 %v1981
        %v2019 = vunpack.c.l.b16 %v1982
        %v2020 = vunpack.c.l.b16 %v1983
        %v2021 = vunpack.c.l.b16 %v1984
        %v2022 = vunpack.c.l.b16 %v1985
        %v2023 = vunpack.c.l.b16 %v1986
        %v2024 = vunpack.c.l.b16 %v1987
        %v2025 = vunpack.c.l.b16 %v1988
        %v2026 = vunpack.c.l.b16 %v1989
        %v2027 = vunpack.c.l.b16 %v1990
        %v2028 = vunpack.c.l.b16 %v1991
        %v2029 = vunpack.c.l.b16 %v1992
        %v2030 = vunpack.c.l.b16 %v1993
        %v2031 = vunpack.c.l.b16 %v1994
        %v2032 = vunpack.c.l.b16 %v1995
        %v2033 = vunpack.c.l.b16 %v1996
        %v2034 = vpack.c.b16 %v2019, %v2018
        %v2035 = vpack.c.b16 %v2021, %v2020
        %v2036 = vpack.c.b16 %v2023, %v2022
        %v2037 = vpack.c.b16 %v2025, %v2024
        %v2038 = vpack.c.b16 %v2027, %v2026
        %v2039 = vpack.c.b16 %v2029, %v2028
        %v2040 = vpack.c.b16 %v2031, %v2030
        %v2041 = vpack.c.b16 %v2033, %v2032
        %v2046 = vunpack.c.l.b16 %v1998
        %v2047 = vunpack.c.l.b16 %v1999
        %v2048 = vunpack.c.l.b16 %v2000
        %v2049 = vunpack.c.l.b16 %v2001
        %v2050 = vpack.c.b16 %v2047, %v2046
        %v2051 = vpack.c.b16 %v2049, %v2048
        %v2055 = vsel %vm305, %v2034, 0
        %v2058 = vsel %vm305, %v2035, 0
        %v2061 = vsel %vm305, %v2036, 0
        %v2064 = vsel %vm305, %v2037, 0
        %v2067 = vsel %vm305, %v2038, 0
        %v2070 = vsel %vm305, %v2039, 0
        %v2073 = vsel %vm305, %v2040, 0
        %v2076 = vsel %vm305, %v2041, 0
        %2078 = vmatprep.subr.bf16.mxu0 0
        %2079 = vmatpush1.bf16.msra.mxu0 %v2050
        %2080 = vmatprep.subr.bf16.mxu0 0
        %2081 = vmatpush1.bf16.msra.mxu0 %v2051
        %2082 = vmatprep.subr.bf16.mxu0 0
        %2083 = vmatpush1.bf16.msra.mxu0 0
        %2084 = vmatprep.subr.bf16.mxu0 0
        %2085 = vmatpush1.bf16.msra.mxu0 0
        %2086 = vmatprep.subr.bf16.mxu0 0
        %2087 = vmatpush1.bf16.msra.mxu0 0
        %2088 = vmatprep.subr.bf16.mxu0 0
        %2089 = vmatpush1.bf16.msra.mxu0 0
        %2090 = vmatprep.subr.bf16.mxu0 0
        %2091 = vmatpush1.bf16.msra.mxu0 0
        %2092 = vmatprep.subr.bf16.mxu0 0
        %2093 = vmatpush1.bf16.msra.mxu0 0
        %2094 = vmatprep.subr.bf16.mxu0 0
        %2095 = vmatpush1.bf16.msra.mxu0 0
        %2096 = vmatprep.subr.bf16.mxu0 0
        %2097 = vmatpush1.bf16.msra.mxu0 0
        %2098 = vmatprep.subr.bf16.mxu0 0
        %2099 = vmatpush1.bf16.msra.mxu0 0
        %2100 = vmatprep.subr.bf16.mxu0 0
        %2101 = vmatpush1.bf16.msra.mxu0 0
        %2102 = vmatprep.subr.bf16.mxu0 0
        %2103 = vmatpush1.bf16.msra.mxu0 0
        %2104 = vmatprep.subr.bf16.mxu0 0
        %2105 = vmatpush1.bf16.msra.mxu0 0
        %2106 = vmatprep.subr.bf16.mxu0 0
        %2107 = vmatpush1.bf16.msra.mxu0 0
        %2108 = vmatprep.subr.bf16.mxu0 0
        %2109 = vmatpush1.bf16.msra.mxu0 0
        %2110 = vmatprep.mubr.bf16.mxu0 0
        %2111 = vmatmul.mubr.bf16.gmra.mrb[0].mxu0 %v2055
        %v2112 = vpop.f32.mrb[0].mxu0
        %v2113 = vadd.f32 0.0, %v2112
        %v2114 = vpop.f32.mrb[0].mxu0
        %v2115 = vpop.f32.mrb[0].mxu0
        %v2116 = vadd.f32 0.0, %v2115
        %v2117 = vpop.f32.mrb[0].mxu0
        %2118 = vmatprep.mubr.bf16.mxu0 0
        %2119 = vmatmul.mubr.bf16.gmra.mrb[0].mxu0 %v2058
        %v2120 = vpop.f32.mrb[0].mxu0
        %v2121 = vadd.f32 0.0, %v2120
        %v2122 = vpop.f32.mrb[0].mxu0
        %v2123 = vpop.f32.mrb[0].mxu0
        %v2124 = vadd.f32 0.0, %v2123
        %v2125 = vpop.f32.mrb[0].mxu0
        %2126 = vmatprep.mubr.bf16.mxu0 0
        %2127 = vmatmul.mubr.bf16.gmra.mrb[0].mxu0 %v2061
        %v2128 = vpop.f32.mrb[0].mxu0
        %v2129 = vadd.f32 0.0, %v2128
        %v2130 = vpop.f32.mrb[0].mxu0
        %v2131 = vpop.f32.mrb[0].mxu0
        %v2132 = vadd.f32 0.0, %v2131
        %v2133 = vpop.f32.mrb[0].mxu0
        %2134 = vmatprep.mubr.bf16.mxu0 0
        %2135 = vmatmul.mubr.bf16.gmra.mrb[0].mxu0 %v2064
        %v2136 = vpop.f32.mrb[0].mxu0
        %v2137 = vadd.f32 0.0, %v2136
        %v2138 = vpop.f32.mrb[0].mxu0
        %v2139 = vpop.f32.mrb[0].mxu0
        %v2140 = vadd.f32 0.0, %v2139
        %v2141 = vpop.f32.mrb[0].mxu0
        %2142 = vmatprep.mubr.bf16.mxu0 0
        %2143 = vmatmul.mubr.bf16.gmra.mrb[0].mxu0 %v2067
        %v2144 = vpop.f32.mrb[0].mxu0
        %v2145 = vadd.f32 0.0, %v2144
        %v2146 = vpop.f32.mrb[0].mxu0
        %v2147 = vpop.f32.mrb[0].mxu0
        %v2148 = vadd.f32 0.0, %v2147
        %v2149 = vpop.f32.mrb[0].mxu0
        %2150 = vmatprep.mubr.bf16.mxu0 0
        %2151 = vmatmul.mubr.bf16.gmra.mrb[0].mxu0 %v2070
        %v2152 = vpop.f32.mrb[0].mxu0
        %v2153 = vadd.f32 0.0, %v2152
        %v2154 = vpop.f32.mrb[0].mxu0
        %v2155 = vpop.f32.mrb[0].mxu0
        %v2156 = vadd.f32 0.0, %v2155
        %v2157 = vpop.f32.mrb[0].mxu0
        %2158 = vmatprep.mubr.bf16.mxu0 0
        %2159 = vmatmul.mubr.bf16.gmra.mrb[0].mxu0 %v2073
        %v2160 = vpop.f32.mrb[0].mxu0
        %v2161 = vadd.f32 0.0, %v2160
        %v2162 = vpop.f32.mrb[0].mxu0
        %v2163 = vpop.f32.mrb[0].mxu0
        %v2164 = vadd.f32 0.0, %v2163
        %v2165 = vpop.f32.mrb[0].mxu0
        %2166 = vmatprep.mubr.bf16.mxu0 0
        %2167 = vmatmul.mubr.bf16.gmra.mrb[0].mxu0 %v2076
        %v2168 = vpop.f32.mrb[0].mxu0
        %v2169 = vadd.f32 0.0, %v2168
        %v2170 = vpop.f32.mrb[0].mxu0
        %v2171 = vpop.f32.mrb[0].mxu0
        %v2172 = vadd.f32 0.0, %v2171
        %v2173 = vpop.f32.mrb[0].mxu0
        %2174 = vdwg.mxu0
        %v2175 = vadd.f32 %v1964, %v2113
        %v2176 = vadd.f32 %v1965, %v2116
        %v2177 = vadd.f32 %v1966, %v2121
        %v2178 = vadd.f32 %v1967, %v2124
        %v2179 = vadd.f32 %v1968, %v2129
        %v2180 = vadd.f32 %v1969, %v2132
        %v2181 = vadd.f32 %v1970, %v2137
        %v2182 = vadd.f32 %v1971, %v2140
        %v2183 = vadd.f32 %v1972, %v2145
        %v2184 = vadd.f32 %v1973, %v2148
        %v2185 = vadd.f32 %v1974, %v2153
        %v2186 = vadd.f32 %v1975, %v2156
        %v2187 = vadd.f32 %v1976, %v2161
        %v2188 = vadd.f32 %v1977, %v2164
        %v2189 = vadd.f32 %v1978, %v2169
        %v2190 = vadd.f32 %v1979, %v2172
        %v2191 = vld [vmem:[%s1980] sm:$0xf]
        %v2192 = vld [vmem:[%s1980 + $0x4] sm:$0xf]
        %v2193 = vld [vmem:[%s1980 + $0x8] sm:$0x1]
        %v2194 = vld [vmem:[%s1980 + $0xc] sm:$0xf]
        %v2195 = vld [vmem:[%s1980 + $0x10] sm:$0xf]
        %v2196 = vld [vmem:[%s1980 + $0x14] sm:$0x1]
        %v2197 = vld [vmem:[%s1980 + $0x18] sm:$0xf]
        %v2198 = vld [vmem:[%s1980 + $0x1c] sm:$0xf]
        %v2199 = vld [vmem:[%s1980 + $0x20] sm:$0x1]
        %v2200 = vld [vmem:[%s1980 + $0x24] sm:$0xf]
        %v2201 = vld [vmem:[%s1980 + $0x28] sm:$0xf]
        %v2202 = vld [vmem:[%s1980 + $0x2c] sm:$0x1]
        %v2203 = vld [vmem:[%s1980 + $0x30] sm:$0xf]
        %v2204 = vld [vmem:[%s1980 + $0x34] sm:$0xf]
        %v2205 = vld [vmem:[%s1980 + $0x38] sm:$0x1]
        %v2206 = vld [vmem:[%s1980 + $0x3c] sm:$0xf]
        %v2207 = vld [vmem:[%s1980 + $0x40] sm:$0xf]
        %v2208 = vld [vmem:[%s1980 + $0x44] sm:$0x1]
        %v2209 = vld [vmem:[%s1980 + $0x48] sm:$0xf]
        %v2210 = vld [vmem:[%s1980 + $0x4c] sm:$0xf]
        %v2211 = vld [vmem:[%s1980 + $0x50] sm:$0x1]
        %v2212 = vld [vmem:[%s1980 + $0x54] sm:$0xf]
        %v2213 = vld [vmem:[%s1980 + $0x58] sm:$0xf]
        %v2214 = vld [vmem:[%s1980 + $0x5c] sm:$0x1]
        %v2216 = vshrl.u32 %v2191, 16
        %v2218 = vrot.slane %v2216, 4
        %v2219 = vshll.u32 %v2191, 16
        %v2221 = vrot.slane %v2219, 5
        %v2222 = vor.u32 %v2218, %v2221
        %v2223 = vrot.slane %v2222, 4
        %v2225 = vshll.u32 %v2192, 16
        %v2227 = vrot.slane %v2225, 5
        %v2228 = vsel %vm469, %v2223, %v2227
        %v2229 = vshrl.u32 %v2192, 16
        %v2231 = vrot.slane %v2229, 4
        %v2232 = vor.u32 %v2231, %v2227
        %v2233 = vrot.slane %v2232, 4
        %v2235 = vshll.u32 %v2193, 16
        %v2237 = vrot.slane %v2235, 5
        %v2238 = vsel %vm469, %v2233, %v2237
        %v2240 = vshrl.u32 %v2194, 16
        %v2242 = vrot.slane %v2240, 4
        %v2243 = vshll.u32 %v2194, 16
        %v2245 = vrot.slane %v2243, 5
        %v2246 = vor.u32 %v2242, %v2245
        %v2247 = vrot.slane %v2246, 4
        %v2249 = vshll.u32 %v2195, 16
        %v2251 = vrot.slane %v2249, 5
        %v2252 = vsel %vm469, %v2247, %v2251
        %v2253 = vshrl.u32 %v2195, 16
        %v2255 = vrot.slane %v2253, 4
        %v2256 = vor.u32 %v2255, %v2251
        %v2257 = vrot.slane %v2256, 4
        %v2259 = vshll.u32 %v2196, 16
        %v2261 = vrot.slane %v2259, 5
        %v2262 = vsel %vm469, %v2257, %v2261
        %v2264 = vshrl.u32 %v2197, 16
        %v2266 = vrot.slane %v2264, 4
        %v2267 = vshll.u32 %v2197, 16
        %v2269 = vrot.slane %v2267, 5
        %v2270 = vor.u32 %v2266, %v2269
        %v2271 = vrot.slane %v2270, 4
        %v2273 = vshll.u32 %v2198, 16
        %v2275 = vrot.slane %v2273, 5
        %v2276 = vsel %vm469, %v2271, %v2275
        %v2277 = vshrl.u32 %v2198, 16
        %v2279 = vrot.slane %v2277, 4
        %v2280 = vor.u32 %v2279, %v2275
        %v2281 = vrot.slane %v2280, 4
        %v2283 = vshll.u32 %v2199, 16
        %v2285 = vrot.slane %v2283, 5
        %v2286 = vsel %vm469, %v2281, %v2285
        %v2288 = vshrl.u32 %v2200, 16
        %v2290 = vrot.slane %v2288, 4
        %v2291 = vshll.u32 %v2200, 16
        %v2293 = vrot.slane %v2291, 5
        %v2294 = vor.u32 %v2290, %v2293
        %v2295 = vrot.slane %v2294, 4
        %v2297 = vshll.u32 %v2201, 16
        %v2299 = vrot.slane %v2297, 5
        %v2300 = vsel %vm469, %v2295, %v2299
        %v2301 = vshrl.u32 %v2201, 16
        %v2303 = vrot.slane %v2301, 4
        %v2304 = vor.u32 %v2303, %v2299
        %v2305 = vrot.slane %v2304, 4
        %v2307 = vshll.u32 %v2202, 16
        %v2309 = vrot.slane %v2307, 5
        %v2310 = vsel %vm469, %v2305, %v2309
        %v2312 = vshrl.u32 %v2203, 16
        %v2314 = vrot.slane %v2312, 4
        %v2315 = vshll.u32 %v2203, 16
        %v2317 = vrot.slane %v2315, 5
        %v2318 = vor.u32 %v2314, %v2317
        %v2319 = vrot.slane %v2318, 4
        %v2321 = vshll.u32 %v2204, 16
        %v2323 = vrot.slane %v2321, 5
        %v2324 = vsel %vm469, %v2319, %v2323
        %v2325 = vshrl.u32 %v2204, 16
        %v2327 = vrot.slane %v2325, 4
        %v2328 = vor.u32 %v2327, %v2323
        %v2329 = vrot.slane %v2328, 4
        %v2331 = vshll.u32 %v2205, 16
        %v2333 = vrot.slane %v2331, 5
        %v2334 = vsel %vm469, %v2329, %v2333
        %v2336 = vshrl.u32 %v2206, 16
        %v2338 = vrot.slane %v2336, 4
        %v2339 = vshll.u32 %v2206, 16
        %v2341 = vrot.slane %v2339, 5
        %v2342 = vor.u32 %v2338, %v2341
        %v2343 = vrot.slane %v2342, 4
        %v2345 = vshll.u32 %v2207, 16
        %v2347 = vrot.slane %v2345, 5
        %v2348 = vsel %vm469, %v2343, %v2347
        %v2349 = vshrl.u32 %v2207, 16
        %v2351 = vrot.slane %v2349, 4
        %v2352 = vor.u32 %v2351, %v2347
        %v2353 = vrot.slane %v2352, 4
        %v2355 = vshll.u32 %v2208, 16
        %v2357 = vrot.slane %v2355, 5
        %v2358 = vsel %vm469, %v2353, %v2357
        %v2360 = vshrl.u32 %v2209, 16
        %v2362 = vrot.slane %v2360, 4
        %v2363 = vshll.u32 %v2209, 16
        %v2365 = vrot.slane %v2363, 5
        %v2366 = vor.u32 %v2362, %v2365
        %v2367 = vrot.slane %v2366, 4
        %v2369 = vshll.u32 %v2210, 16
        %v2371 = vrot.slane %v2369, 5
        %v2372 = vsel %vm469, %v2367, %v2371
        %v2373 = vshrl.u32 %v2210, 16
        %v2375 = vrot.slane %v2373, 4
        %v2376 = vor.u32 %v2375, %v2371
        %v2377 = vrot.slane %v2376, 4
        %v2379 = vshll.u32 %v2211, 16
        %v2381 = vrot.slane %v2379, 5
        %v2382 = vsel %vm469, %v2377, %v2381
        %v2384 = vshrl.u32 %v2212, 16
        %v2386 = vrot.slane %v2384, 4
        %v2387 = vshll.u32 %v2212, 16
        %v2389 = vrot.slane %v2387, 5
        %v2390 = vor.u32 %v2386, %v2389
        %v2391 = vrot.slane %v2390, 4
        %v2393 = vshll.u32 %v2213, 16
        %v2395 = vrot.slane %v2393, 5
        %v2396 = vsel %vm469, %v2391, %v2395
        %v2397 = vshrl.u32 %v2213, 16
        %v2399 = vrot.slane %v2397, 4
        %v2400 = vor.u32 %v2399, %v2395
        %v2401 = vrot.slane %v2400, 4
        %v2403 = vshll.u32 %v2214, 16
        %v2405 = vrot.slane %v2403, 5
        %v2406 = vsel %vm469, %v2401, %v2405
        %s2407 = scalar_lea.vmem %s2, 112
        %v2408 = vld [vmem:[%s2407] sm:$0xf]
        %v2409 = vld [vmem:[%s2407 + $0x4] sm:$0xf]
        %v2410 = vld [vmem:[%s2407 + $0x8] sm:$0xf]
        %v2411 = vld [vmem:[%s2407 + $0xc] sm:$0xf]
        %v2412 = vunpack.c.l.b16 %v2228
        %v2413 = vunpack.c.l.b16 %v2238
        %v2414 = vunpack.c.l.b16 %v2252
        %v2415 = vunpack.c.l.b16 %v2262
        %v2416 = vunpack.c.l.b16 %v2276
        %v2417 = vunpack.c.l.b16 %v2286
        %v2418 = vunpack.c.l.b16 %v2300
        %v2419 = vunpack.c.l.b16 %v2310
        %v2420 = vunpack.c.l.b16 %v2324
        %v2421 = vunpack.c.l.b16 %v2334
        %v2422 = vunpack.c.l.b16 %v2348
        %v2423 = vunpack.c.l.b16 %v2358
        %v2424 = vunpack.c.l.b16 %v2372
        %v2425 = vunpack.c.l.b16 %v2382
        %v2426 = vunpack.c.l.b16 %v2396
        %v2427 = vunpack.c.l.b16 %v2406
        %v2428 = vpack.c.b16 %v2413, %v2412
        %v2429 = vpack.c.b16 %v2415, %v2414
        %v2430 = vpack.c.b16 %v2417, %v2416
        %v2431 = vpack.c.b16 %v2419, %v2418
        %v2432 = vpack.c.b16 %v2421, %v2420
        %v2433 = vpack.c.b16 %v2423, %v2422
        %v2434 = vpack.c.b16 %v2425, %v2424
        %v2435 = vpack.c.b16 %v2427, %v2426
        %v2440 = vunpack.c.l.b16 %v2408
        %v2441 = vunpack.c.l.b16 %v2409
        %v2442 = vunpack.c.l.b16 %v2410
        %v2443 = vunpack.c.l.b16 %v2411
        %v2444 = vpack.c.b16 %v2441, %v2440
        %v2445 = vpack.c.b16 %v2443, %v2442
        %v2449 = vsel %vm305, %v2428, 0
        %v2452 = vsel %vm305, %v2429, 0
        %v2455 = vsel %vm305, %v2430, 0
        %v2458 = vsel %vm305, %v2431, 0
        %v2461 = vsel %vm305, %v2432, 0
        %v2464 = vsel %vm305, %v2433, 0
        %v2467 = vsel %vm305, %v2434, 0
        %v2470 = vsel %vm305, %v2435, 0
        %2472 = vmatprep.subr.bf16.mxu0 0
        %2473 = vmatpush1.bf16.msra.mxu0 %v2444
        %2474 = vmatprep.subr.bf16.mxu0 0
        %2475 = vmatpush1.bf16.msra.mxu0 %v2445
        %2476 = vmatprep.subr.bf16.mxu0 0
        %2477 = vmatpush1.bf16.msra.mxu0 0
        %2478 = vmatprep.subr.bf16.mxu0 0
        %2479 = vmatpush1.bf16.msra.mxu0 0
        %2480 = vmatprep.subr.bf16.mxu0 0
        %2481 = vmatpush1.bf16.msra.mxu0 0
        %2482 = vmatprep.subr.bf16.mxu0 0
        %2483 = vmatpush1.bf16.msra.mxu0 0
        %2484 = vmatprep.subr.bf16.mxu0 0
        %2485 = vmatpush1.bf16.msra.mxu0 0
        %2486 = vmatprep.subr.bf16.mxu0 0
        %2487 = vmatpush1.bf16.msra.mxu0 0
        %2488 = vmatprep.subr.bf16.mxu0 0
        %2489 = vmatpush1.bf16.msra.mxu0 0
        %2490 = vmatprep.subr.bf16.mxu0 0
        %2491 = vmatpush1.bf16.msra.mxu0 0
        %2492 = vmatprep.subr.bf16.mxu0 0
        %2493 = vmatpush1.bf16.msra.mxu0 0
        %2494 = vmatprep.subr.bf16.mxu0 0
        %2495 = vmatpush1.bf16.msra.mxu0 0
        %2496 = vmatprep.subr.bf16.mxu0 0
        %2497 = vmatpush1.bf16.msra.mxu0 0
        %2498 = vmatprep.subr.bf16.mxu0 0
        %2499 = vmatpush1.bf16.msra.mxu0 0
        %2500 = vmatprep.subr.bf16.mxu0 0
        %2501 = vmatpush1.bf16.msra.mxu0 0
        %2502 = vmatprep.subr.bf16.mxu0 0
        %2503 = vmatpush1.bf16.msra.mxu0 0
        %2504 = vmatprep.mubr.bf16.mxu0 0
        %2505 = vmatmul.mubr.bf16.gmra.mrb[0].mxu0 %v2449
        %v2506 = vpop.f32.mrb[0].mxu0
        %v2507 = vadd.f32 0.0, %v2506
        %v2508 = vpop.f32.mrb[0].mxu0
        %v2509 = vpop.f32.mrb[0].mxu0
        %v2510 = vadd.f32 0.0, %v2509
        %v2511 = vpop.f32.mrb[0].mxu0
        %2512 = vmatprep.mubr.bf16.mxu0 0
        %2513 = vmatmul.mubr.bf16.gmra.mrb[0].mxu0 %v2452
        %v2514 = vpop.f32.mrb[0].mxu0
        %v2515 = vadd.f32 0.0, %v2514
        %v2516 = vpop.f32.mrb[0].mxu0
        %v2517 = vpop.f32.mrb[0].mxu0
        %v2518 = vadd.f32 0.0, %v2517
        %v2519 = vpop.f32.mrb[0].mxu0
        %2520 = vmatprep.mubr.bf16.mxu0 0
        %2521 = vmatmul.mubr.bf16.gmra.mrb[0].mxu0 %v2455
        %v2522 = vpop.f32.mrb[0].mxu0
        %v2523 = vadd.f32 0.0, %v2522
        %v2524 = vpop.f32.mrb[0].mxu0
        %v2525 = vpop.f32.mrb[0].mxu0
        %v2526 = vadd.f32 0.0, %v2525
        %v2527 = vpop.f32.mrb[0].mxu0
        %2528 = vmatprep.mubr.bf16.mxu0 0
        %2529 = vmatmul.mubr.bf16.gmra.mrb[0].mxu0 %v2458
        %v2530 = vpop.f32.mrb[0].mxu0
        %v2531 = vadd.f32 0.0, %v2530
        %v2532 = vpop.f32.mrb[0].mxu0
        %v2533 = vpop.f32.mrb[0].mxu0
        %v2534 = vadd.f32 0.0, %v2533
        %v2535 = vpop.f32.mrb[0].mxu0
        %2536 = vmatprep.mubr.bf16.mxu0 0
        %2537 = vmatmul.mubr.bf16.gmra.mrb[0].mxu0 %v2461
        %v2538 = vpop.f32.mrb[0].mxu0
        %v2539 = vadd.f32 0.0, %v2538
        %v2540 = vpop.f32.mrb[0].mxu0
        %v2541 = vpop.f32.mrb[0].mxu0
        %v2542 = vadd.f32 0.0, %v2541
        %v2543 = vpop.f32.mrb[0].mxu0
        %2544 = vmatprep.mubr.bf16.mxu0 0
        %2545 = vmatmul.mubr.bf16.gmra.mrb[0].mxu0 %v2464
        %v2546 = vpop.f32.mrb[0].mxu0
        %v2547 = vadd.f32 0.0, %v2546
        %v2548 = vpop.f32.mrb[0].mxu0
        %v2549 = vpop.f32.mrb[0].mxu0
        %v2550 = vadd.f32 0.0, %v2549
        %v2551 = vpop.f32.mrb[0].mxu0
        %2552 = vmatprep.mubr.bf16.mxu0 0
        %2553 = vmatmul.mubr.bf16.gmra.mrb[0].mxu0 %v2467
        %v2554 = vpop.f32.mrb[0].mxu0
        %v2555 = vadd.f32 0.0, %v2554
        %v2556 = vpop.f32.mrb[0].mxu0
        %v2557 = vpop.f32.mrb[0].mxu0
        %v2558 = vadd.f32 0.0, %v2557
        %v2559 = vpop.f32.mrb[0].mxu0
        %2560 = vmatprep.mubr.bf16.mxu0 0
        %2561 = vmatmul.mubr.bf16.gmra.mrb[0].mxu0 %v2470
        %v2562 = vpop.f32.mrb[0].mxu0
        %v2563 = vadd.f32 0.0, %v2562
        %v2564 = vpop.f32.mrb[0].mxu0
        %v2565 = vpop.f32.mrb[0].mxu0
        %v2566 = vadd.f32 0.0, %v2565
        %v2567 = vpop.f32.mrb[0].mxu0
        %2568 = vdwg.mxu0
        %v2569 = vadd.f32 %v2175, %v2507
        %v2570 = vadd.f32 %v2176, %v2510
        %v2571 = vadd.f32 %v2177, %v2515
        %v2572 = vadd.f32 %v2178, %v2518
        %v2573 = vadd.f32 %v2179, %v2523
        %v2574 = vadd.f32 %v2180, %v2526
        %v2575 = vadd.f32 %v2181, %v2531
        %v2576 = vadd.f32 %v2182, %v2534
        %v2577 = vadd.f32 %v2183, %v2539
        %v2578 = vadd.f32 %v2184, %v2542
        %v2579 = vadd.f32 %v2185, %v2547
        %v2580 = vadd.f32 %v2186, %v2550
        %v2581 = vadd.f32 %v2187, %v2555
        %v2582 = vadd.f32 %v2188, %v2558
        %v2583 = vadd.f32 %v2189, %v2563
        %v2584 = vadd.f32 %v2190, %v2566
        %v2585 = vld [vmem:[%s1980] sm:$0xe]
        %v2586 = vld [vmem:[%s1980 + $0xc] sm:$0xe]
        %v2587 = vld [vmem:[%s1980 + $0x18] sm:$0xe]
        %v2588 = vld [vmem:[%s1980 + $0x24] sm:$0xe]
        %v2589 = vld [vmem:[%s1980 + $0x30] sm:$0xe]
        %v2590 = vld [vmem:[%s1980 + $0x3c] sm:$0xe]
        %v2591 = vld [vmem:[%s1980 + $0x48] sm:$0xe]
        %v2592 = vld [vmem:[%s1980 + $0x54] sm:$0xe]
        %v2617 = vrot.slane %v2585, 5
        %v2618 = vrot.slane %v2617, 4
        %v2619 = vrot.slane %v2192, 5
        %v2620 = vsel %vm874, %v2618, %v2619
        %v2621 = vrot.slane %v2619, 4
        %v2622 = vrot.slane %v2193, 5
        %v2623 = vsel %vm874, %v2621, %v2622
        %v2624 = vrot.slane %v2586, 5
        %v2625 = vrot.slane %v2624, 4
        %v2626 = vrot.slane %v2195, 5
        %v2627 = vsel %vm874, %v2625, %v2626
        %v2628 = vrot.slane %v2626, 4
        %v2629 = vrot.slane %v2196, 5
        %v2630 = vsel %vm874, %v2628, %v2629
        %v2631 = vrot.slane %v2587, 5
        %v2632 = vrot.slane %v2631, 4
        %v2633 = vrot.slane %v2198, 5
        %v2634 = vsel %vm874, %v2632, %v2633
        %v2635 = vrot.slane %v2633, 4
        %v2636 = vrot.slane %v2199, 5
        %v2637 = vsel %vm874, %v2635, %v2636
        %v2638 = vrot.slane %v2588, 5
        %v2639 = vrot.slane %v2638, 4
        %v2640 = vrot.slane %v2201, 5
        %v2641 = vsel %vm874, %v2639, %v2640
        %v2642 = vrot.slane %v2640, 4
        %v2643 = vrot.slane %v2202, 5
        %v2644 = vsel %vm874, %v2642, %v2643
        %v2645 = vrot.slane %v2589, 5
        %v2646 = vrot.slane %v2645, 4
        %v2647 = vrot.slane %v2204, 5
        %v2648 = vsel %vm874, %v2646, %v2647
        %v2649 = vrot.slane %v2647, 4
        %v2650 = vrot.slane %v2205, 5
        %v2651 = vsel %vm874, %v2649, %v2650
        %v2652 = vrot.slane %v2590, 5
        %v2653 = vrot.slane %v2652, 4
        %v2654 = vrot.slane %v2207, 5
        %v2655 = vsel %vm874, %v2653, %v2654
        %v2656 = vrot.slane %v2654, 4
        %v2657 = vrot.slane %v2208, 5
        %v2658 = vsel %vm874, %v2656, %v2657
        %v2659 = vrot.slane %v2591, 5
        %v2660 = vrot.slane %v2659, 4
        %v2661 = vrot.slane %v2210, 5
        %v2662 = vsel %vm874, %v2660, %v2661
        %v2663 = vrot.slane %v2661, 4
        %v2664 = vrot.slane %v2211, 5
        %v2665 = vsel %vm874, %v2663, %v2664
        %v2666 = vrot.slane %v2592, 5
        %v2667 = vrot.slane %v2666, 4
        %v2668 = vrot.slane %v2213, 5
        %v2669 = vsel %vm874, %v2667, %v2668
        %v2670 = vrot.slane %v2668, 4
        %v2671 = vrot.slane %v2214, 5
        %v2672 = vsel %vm874, %v2670, %v2671
        %s2673 = scalar_lea.vmem %s2, 128
        %v2674 = vld [vmem:[%s2673] sm:$0xf]
        %v2675 = vld [vmem:[%s2673 + $0x4] sm:$0xf]
        %v2676 = vld [vmem:[%s2673 + $0x8] sm:$0xf]
        %v2677 = vld [vmem:[%s2673 + $0xc] sm:$0xf]
        %v2678 = vunpack.c.l.b16 %v2620
        %v2679 = vunpack.c.l.b16 %v2623
        %v2680 = vunpack.c.l.b16 %v2627
        %v2681 = vunpack.c.l.b16 %v2630
        %v2682 = vunpack.c.l.b16 %v2634
        %v2683 = vunpack.c.l.b16 %v2637
        %v2684 = vunpack.c.l.b16 %v2641
        %v2685 = vunpack.c.l.b16 %v2644
        %v2686 = vunpack.c.l.b16 %v2648
        %v2687 = vunpack.c.l.b16 %v2651
        %v2688 = vunpack.c.l.b16 %v2655
        %v2689 = vunpack.c.l.b16 %v2658
        %v2690 = vunpack.c.l.b16 %v2662
        %v2691 = vunpack.c.l.b16 %v2665
        %v2692 = vunpack.c.l.b16 %v2669
        %v2693 = vunpack.c.l.b16 %v2672
        %v2694 = vpack.c.b16 %v2679, %v2678
        %v2695 = vpack.c.b16 %v2681, %v2680
        %v2696 = vpack.c.b16 %v2683, %v2682
        %v2697 = vpack.c.b16 %v2685, %v2684
        %v2698 = vpack.c.b16 %v2687, %v2686
        %v2699 = vpack.c.b16 %v2689, %v2688
        %v2700 = vpack.c.b16 %v2691, %v2690
        %v2701 = vpack.c.b16 %v2693, %v2692
        %v2706 = vunpack.c.l.b16 %v2674
        %v2707 = vunpack.c.l.b16 %v2675
        %v2708 = vunpack.c.l.b16 %v2676
        %v2709 = vunpack.c.l.b16 %v2677
        %v2710 = vpack.c.b16 %v2707, %v2706
        %v2711 = vpack.c.b16 %v2709, %v2708
        %v2715 = vsel %vm305, %v2694, 0
        %v2718 = vsel %vm305, %v2695, 0
        %v2721 = vsel %vm305, %v2696, 0
        %v2724 = vsel %vm305, %v2697, 0
        %v2727 = vsel %vm305, %v2698, 0
        %v2730 = vsel %vm305, %v2699, 0
        %v2733 = vsel %vm305, %v2700, 0
        %v2736 = vsel %vm305, %v2701, 0
        %2738 = vmatprep.subr.bf16.mxu0 0
        %2739 = vmatpush1.bf16.msra.mxu0 %v2710
        %2740 = vmatprep.subr.bf16.mxu0 0
        %2741 = vmatpush1.bf16.msra.mxu0 %v2711
        %2742 = vmatprep.subr.bf16.mxu0 0
        %2743 = vmatpush1.bf16.msra.mxu0 0
        %2744 = vmatprep.subr.bf16.mxu0 0
        %2745 = vmatpush1.bf16.msra.mxu0 0
        %2746 = vmatprep.subr.bf16.mxu0 0
        %2747 = vmatpush1.bf16.msra.mxu0 0
        %2748 = vmatprep.subr.bf16.mxu0 0
        %2749 = vmatpush1.bf16.msra.mxu0 0
        %2750 = vmatprep.subr.bf16.mxu0 0
        %2751 = vmatpush1.bf16.msra.mxu0 0
        %2752 = vmatprep.subr.bf16.mxu0 0
        %2753 = vmatpush1.bf16.msra.mxu0 0
        %2754 = vmatprep.subr.bf16.mxu0 0
        %2755 = vmatpush1.bf16.msra.mxu0 0
        %2756 = vmatprep.subr.bf16.mxu0 0
        %2757 = vmatpush1.bf16.msra.mxu0 0
        %2758 = vmatprep.subr.bf16.mxu0 0
        %2759 = vmatpush1.bf16.msra.mxu0 0
        %2760 = vmatprep.subr.bf16.mxu0 0
        %2761 = vmatpush1.bf16.msra.mxu0 0
        %2762 = vmatprep.subr.bf16.mxu0 0
        %2763 = vmatpush1.bf16.msra.mxu0 0
        %2764 = vmatprep.subr.bf16.mxu0 0
        %2765 = vmatpush1.bf16.msra.mxu0 0
        %2766 = vmatprep.subr.bf16.mxu0 0
        %2767 = vmatpush1.bf16.msra.mxu0 0
        %2768 = vmatprep.subr.bf16.mxu0 0
        %2769 = vmatpush1.bf16.msra.mxu0 0
        %2770 = vmatprep.mubr.bf16.mxu0 0
        %2771 = vmatmul.mubr.bf16.gmra.mrb[0].mxu0 %v2715
        %v2772 = vpop.f32.mrb[0].mxu0
        %v2773 = vadd.f32 0.0, %v2772
        %v2774 = vpop.f32.mrb[0].mxu0
        %v2775 = vpop.f32.mrb[0].mxu0
        %v2776 = vadd.f32 0.0, %v2775
        %v2777 = vpop.f32.mrb[0].mxu0
        %2778 = vmatprep.mubr.bf16.mxu0 0
        %2779 = vmatmul.mubr.bf16.gmra.mrb[0].mxu0 %v2718
        %v2780 = vpop.f32.mrb[0].mxu0
        %v2781 = vadd.f32 0.0, %v2780
        %v2782 = vpop.f32.mrb[0].mxu0
        %v2783 = vpop.f32.mrb[0].mxu0
        %v2784 = vadd.f32 0.0, %v2783
        %v2785 = vpop.f32.mrb[0].mxu0
        %2786 = vmatprep.mubr.bf16.mxu0 0
        %2787 = vmatmul.mubr.bf16.gmra.mrb[0].mxu0 %v2721
        %v2788 = vpop.f32.mrb[0].mxu0
        %v2789 = vadd.f32 0.0, %v2788
        %v2790 = vpop.f32.mrb[0].mxu0
        %v2791 = vpop.f32.mrb[0].mxu0
        %v2792 = vadd.f32 0.0, %v2791
        %v2793 = vpop.f32.mrb[0].mxu0
        %2794 = vmatprep.mubr.bf16.mxu0 0
        %2795 = vmatmul.mubr.bf16.gmra.mrb[0].mxu0 %v2724
        %v2796 = vpop.f32.mrb[0].mxu0
        %v2797 = vadd.f32 0.0, %v2796
        %v2798 = vpop.f32.mrb[0].mxu0
        %v2799 = vpop.f32.mrb[0].mxu0
        %v2800 = vadd.f32 0.0, %v2799
        %v2801 = vpop.f32.mrb[0].mxu0
        %2802 = vmatprep.mubr.bf16.mxu0 0
        %2803 = vmatmul.mubr.bf16.gmra.mrb[0].mxu0 %v2727
        %v2804 = vpop.f32.mrb[0].mxu0
        %v2805 = vadd.f32 0.0, %v2804
        %v2806 = vpop.f32.mrb[0].mxu0
        %v2807 = vpop.f32.mrb[0].mxu0
        %v2808 = vadd.f32 0.0, %v2807
        %v2809 = vpop.f32.mrb[0].mxu0
        %2810 = vmatprep.mubr.bf16.mxu0 0
        %2811 = vmatmul.mubr.bf16.gmra.mrb[0].mxu0 %v2730
        %v2812 = vpop.f32.mrb[0].mxu0
        %v2813 = vadd.f32 0.0, %v2812
        %v2814 = vpop.f32.mrb[0].mxu0
        %v2815 = vpop.f32.mrb[0].mxu0
        %v2816 = vadd.f32 0.0, %v2815
        %v2817 = vpop.f32.mrb[0].mxu0
        %2818 = vmatprep.mubr.bf16.mxu0 0
        %2819 = vmatmul.mubr.bf16.gmra.mrb[0].mxu0 %v2733
        %v2820 = vpop.f32.mrb[0].mxu0
        %v2821 = vadd.f32 0.0, %v2820
        %v2822 = vpop.f32.mrb[0].mxu0
        %v2823 = vpop.f32.mrb[0].mxu0
        %v2824 = vadd.f32 0.0, %v2823
        %v2825 = vpop.f32.mrb[0].mxu0
        %2826 = vmatprep.mubr.bf16.mxu0 0
        %2827 = vmatmul.mubr.bf16.gmra.mrb[0].mxu0 %v2736
        %v2828 = vpop.f32.mrb[0].mxu0
        %v2829 = vadd.f32 0.0, %v2828
        %v2830 = vpop.f32.mrb[0].mxu0
        %v2831 = vpop.f32.mrb[0].mxu0
        %v2832 = vadd.f32 0.0, %v2831
        %v2833 = vpop.f32.mrb[0].mxu0
        %2834 = vdwg.mxu0
        %v2835 = vadd.f32 %v2569, %v2773
        %v2836 = vadd.f32 %v2570, %v2776
        %v2837 = vadd.f32 %v2571, %v2781
        %v2838 = vadd.f32 %v2572, %v2784
        %v2839 = vadd.f32 %v2573, %v2789
        %v2840 = vadd.f32 %v2574, %v2792
        %v2841 = vadd.f32 %v2575, %v2797
        %v2842 = vadd.f32 %v2576, %v2800
        %v2843 = vadd.f32 %v2577, %v2805
        %v2844 = vadd.f32 %v2578, %v2808
        %v2845 = vadd.f32 %v2579, %v2813
        %v2846 = vadd.f32 %v2580, %v2816
        %v2847 = vadd.f32 %v2581, %v2821
        %v2848 = vadd.f32 %v2582, %v2824
        %v2849 = vadd.f32 %v2583, %v2829
        %v2850 = vadd.f32 %v2584, %v2832
        %s2851 = sld [smem:[#allocation2]]
        %vm2852 = vcmp.ge.f32.partialorder %v2835, 0.0
        %vm2853 = vcmp.ge.f32.partialorder %v2836, 0.0
        %vm2854 = vcmp.ge.f32.partialorder %v2837, 0.0
        %vm2855 = vcmp.ge.f32.partialorder %v2838, 0.0
        %vm2856 = vcmp.ge.f32.partialorder %v2839, 0.0
        %vm2857 = vcmp.ge.f32.partialorder %v2840, 0.0
        %vm2858 = vcmp.ge.f32.partialorder %v2841, 0.0
        %vm2859 = vcmp.ge.f32.partialorder %v2842, 0.0
        %vm2860 = vcmp.ge.f32.partialorder %v2843, 0.0
        %vm2861 = vcmp.ge.f32.partialorder %v2844, 0.0
        %vm2862 = vcmp.ge.f32.partialorder %v2845, 0.0
        %vm2863 = vcmp.ge.f32.partialorder %v2846, 0.0
        %vm2864 = vcmp.ge.f32.partialorder %v2847, 0.0
        %vm2865 = vcmp.ge.f32.partialorder %v2848, 0.0
        %vm2866 = vcmp.ge.f32.partialorder %v2849, 0.0
        %vm2867 = vcmp.ge.f32.partialorder %v2850, 0.0
        %v2868 = vstv %s2851
        %v2869 = vmul.f32 %v2868, %v2835
        %v2870 = vmul.f32 %v2868, %v2836
        %v2871 = vmul.f32 %v2868, %v2837
        %v2872 = vmul.f32 %v2868, %v2838
        %v2873 = vmul.f32 %v2868, %v2839
        %v2874 = vmul.f32 %v2868, %v2840
        %v2875 = vmul.f32 %v2868, %v2841
        %v2876 = vmul.f32 %v2868, %v2842
        %v2877 = vmul.f32 %v2868, %v2843
        %v2878 = vmul.f32 %v2868, %v2844
        %v2879 = vmul.f32 %v2868, %v2845
        %v2880 = vmul.f32 %v2868, %v2846
        %v2881 = vmul.f32 %v2868, %v2847
        %v2882 = vmul.f32 %v2868, %v2848
        %v2883 = vmul.f32 %v2868, %v2849
        %v2884 = vmul.f32 %v2868, %v2850
        %v2885 = vsel %vm2852, %v2835, %v2869
        %v2886 = vsel %vm2853, %v2836, %v2870
        %v2887 = vsel %vm2854, %v2837, %v2871
        %v2888 = vsel %vm2855, %v2838, %v2872
        %v2889 = vsel %vm2856, %v2839, %v2873
        %v2890 = vsel %vm2857, %v2840, %v2874
        %v2891 = vsel %vm2858, %v2841, %v2875
        %v2892 = vsel %vm2859, %v2842, %v2876
        %v2893 = vsel %vm2860, %v2843, %v2877
        %v2894 = vsel %vm2861, %v2844, %v2878
        %v2895 = vsel %vm2862, %v2845, %v2879
        %v2896 = vsel %vm2863, %v2846, %v2880
        %v2897 = vsel %vm2864, %v2847, %v2881
        %v2898 = vsel %vm2865, %v2848, %v2882
        %v2899 = vsel %vm2866, %v2849, %v2883
        %v2900 = vsel %vm2867, %v2850, %v2884
        %2901 = vst [vmem:[%s215] sm:$0xff] %v2885
        %2902 = vst [vmem:[%s215 + $0x8] sm:$0xff] %v2886
        %2903 = vst [vmem:[%s215 + $0x10] sm:$0xff] %v2887
        %2904 = vst [vmem:[%s215 + $0x18] sm:$0xff] %v2888
        %2905 = vst [vmem:[%s215 + $0x20] sm:$0xff] %v2889
        %2906 = vst [vmem:[%s215 + $0x28] sm:$0xff] %v2890
        %2907 = vst [vmem:[%s215 + $0x30] sm:$0xff] %v2891
        %2908 = vst [vmem:[%s215 + $0x38] sm:$0xff] %v2892
        %2909 = vst [vmem:[%s215 + $0x40] sm:$0xff] %v2893
        %2910 = vst [vmem:[%s215 + $0x48] sm:$0xff] %v2894
        %2911 = vst [vmem:[%s215 + $0x50] sm:$0xff] %v2895
        %2912 = vst [vmem:[%s215 + $0x58] sm:$0xff] %v2896
        %2913 = vst [vmem:[%s215 + $0x60] sm:$0xff] %v2897
        %2914 = vst [vmem:[%s215 + $0x68] sm:$0xff] %v2898
        %2915 = vst [vmem:[%s215 + $0x70] sm:$0xff] %v2899
        %2916 = vst [vmem:[%s215 + $0x78] sm:$0xff] %v2900
        %s2917 = sand.u32 %s132, 1
        %s2918 = scalar_lea.sflag [#allocation4], %s2917
        %s2919 = sand.u32 %s132, 1
        %s2920 = smul.addr %s2919, 128
        %s2921 = scalar_lea.vmem [#allocation3], %s2920
        // Predicated region
        $region37: #{tpu_custom_call.1} parent=35 // pred_check
          %p2922 = pneg %p142
        $region38: #{tpu_custom_call.1} parent=35 // pred_check_branch
          %2924 = sbr.rel (%p2922) target = $region40
        $region39: #{tpu_custom_call.1} parent=35 // pred_region
          %s2926 = ssub.s32 2048, 2048
          %2927 = vsyncadd %s2918, %s2926
          %s2928 = smul.addr %s24, 16
          %s2929 = smul.addr %s23, 32
          %s2930 = sadd.s32 %s2928, %s2929
          %s2931 = smul.addr %s2930, 128
          %s2932 = scalar_lea.hbm %s4, %s2931
          %s2933 = sshll.u32 %s2921, 4
          %s2934 = int_to_ptr.vmem [resolvable:$true] %s2933
          %2939 = dma.vmem_to_hbm [thread:$0]  %s2934, 2048, %s2932, %s2918, 128, 128, 8
        $region40: #{tpu_custom_call.1} parent=35 // pred_fallthru
          _
      $region36: #{tpu_custom_call.1} parent=5 // pred_fallthru
        _
      %p2940 = scmp.le.s32.totalorder 2, %s14
      // Predicated region
      $region41: #{tpu_custom_call.1} parent=5 // pred_check
        %p2941 = pneg %p2940
      $region42: #{tpu_custom_call.1} parent=5 // pred_check_branch
        %2943 = sbr.rel (%p2941) target = $region44
      $region43: #{tpu_custom_call.1} parent=5 // pred_region
        %s2944 = ssub.s32 %s14, 2
        // Predicated region
        $region45: #{tpu_custom_call.1} parent=43 // pred_check
          %p2945 = pneg %p148
        $region46: #{tpu_custom_call.1} parent=43 // pred_check_branch
          %2947 = sbr.rel (%p2945) target = $region48
        $region47: #{tpu_custom_call.1} parent=43 // pred_region
          %s2948 = sand.u32 %s133, 1
          %s2949 = scalar_lea.sflag [#allocation4], %s2948
          %s2950 = sand.u32 %s133, 1
          %s2951 = smul.addr %s2950, 128
          %s2952 = scalar_lea.vmem [#allocation3], %s2951
          %2953 = dma.done %s2949, 2048
        $region48: #{tpu_custom_call.1} parent=43 // pred_fallthru
          _
      $region44: #{tpu_custom_call.1} parent=5 // pred_fallthru
        _
    $region6: #{tpu_custom_call.1} parent=1 // loop_footer
      %s18 = sadd.s32 1, %s14
    $region7: #{tpu_custom_call.1} parent=1 // loop_footer_branch
      %13 = sbr.rel target = $region3
    $region8: #{tpu_custom_call.1} parent=1 // loop_exit
      _
    %2954 = vsyncpa [#allocation4], 1
    %s2955 = scalar_lea.sflag [#allocation4], 1
    %2956 = vsyncpa %s2955, 1

</llo_original>
